<compile_context>
chip_gen: v7x
topology: tpu7x:2x2x1
jax: 0.10.0
libtpu: 0.0.40
codegen_flags: <defaults>
</compile_context>

<pallas_src>
import math

import jax
import jax.numpy as jnp
import numpy as np
from jax.experimental import pallas as pl
from jax.experimental.pallas import tpu as pltpu

PAD_token = 1  # padding_idx of nn.Embedding


def _round_up(x, m):
    return (x + m - 1) // m * m


def _row_tile(n, target=512):
    """Largest tile <= target that divides n (n is a multiple of 8)."""
    t = min(n, target)
    while n % t:
        t -= 8
    return t


# ----------------------------------------------------------------------------
# Kernel 1: bidirectional GRU, grid=(2,) over directions.
#   Prologue: gi = x @ W_ih + b_ih as one big MXU-shaped matmul into VMEM scratch.
#   Recurrence: in-kernel fori_loop over time; only h @ W_hh per step.
#   Packed-sequence semantics: steps with t >= length freeze h and emit zeros.
# ----------------------------------------------------------------------------
def bigru_kernel(lens_ref, x_ref, wih_ref, whh_ref, bih_ref, bhh_ref,
                 out_ref, hn_ref, gi_scratch):
    d = pl.program_id(0)                      # 0 = forward, 1 = backward
    T, Bp, Hp = out_ref.shape

    # ---- hoisted input projection: (T*Bp, Hp) @ (Hp, 3Hp) in bf16, f32 accumulate ----
    x2d = x_ref[...].reshape(T * Bp, Hp).astype(jnp.bfloat16)
    gi_scratch[...] = (
        jnp.dot(x2d, wih_ref[...], preferred_element_type=jnp.float32)
        + bih_ref[...])

    whh = whh_ref[...]        # (Hp, 3Hp) bf16
    bhh = bhh_ref[...]        # (1, 3Hp)  f32
    lens = lens_ref[...]      # (Bp, 1)   int32

    def step(s, h):
        # forward walks t = 0..T-1, backward walks t = T-1..0
        t = (1 - d) * s + d * (T - 1 - s)
        row = pl.multiple_of(t * Bp, Bp)
        gi = gi_scratch[pl.ds(row, Bp), :]                         # (Bp, 3Hp) f32
        gh = jnp.dot(h.astype(jnp.bfloat16), whh,
                     preferred_element_type=jnp.float32) + bhh     # (Bp, 3Hp) f32
        r = jax.nn.sigmoid(gi[:, :Hp] + gh[:, :Hp])
        z = jax.nn.sigmoid(gi[:, Hp:2 * Hp] + gh[:, Hp:2 * Hp])
        n = jnp.tanh(gi[:, 2 * Hp:] + r * gh[:, 2 * Hp:])
        h_new = (1.0 - z) * n + z * h
        valid = t < lens                                           # (Bp, 1) bool
        h_next = jnp.where(valid, h_new, h)                        # freeze past length
        out_ref[pl.ds(t, 1)] = jnp.where(valid, h_next, 0.0)[None]  # packed-seq zeros
        return h_next

    h0 = jnp.zeros((Bp, Hp), jnp.float32)
    hn_ref[...] = jax.lax.fori_loop(0, T, step, h0, unroll=True)


# ----------------------------------------------------------------------------
# Kernel 2: split-weight projection  y = xf @ Wf + xb @ Wb + b  (the shared self.W),
#           row-tiled, lane-dense output blocks.
# ----------------------------------------------------------------------------
def proj_kernel(xf_ref, xb_ref, wf_ref, wb_ref, b_ref, o_ref):
    yf = jnp.dot(xf_ref[...].astype(jnp.bfloat16), wf_ref[...],
                 preferred_element_type=jnp.float32)
    yb = jnp.dot(xb_ref[...].astype(jnp.bfloat16), wb_ref[...],
                 preferred_element_type=jnp.float32)
    o_ref[...] = yf + yb + b_ref[...]


def _project(xf, xb, wf, wb, b):
    N, Hp = xf.shape
    rt = _row_tile(N)
    return pl.pallas_call(
        proj_kernel,
        out_shape=jax.ShapeDtypeStruct((N, Hp), jnp.float32),
        grid_spec=pltpu.PrefetchScalarGridSpec(
            num_scalar_prefetch=0,
            grid=(N // rt,),
            in_specs=[
                pl.BlockSpec((rt, Hp), lambda i: (i, 0)),
                pl.BlockSpec((rt, Hp), lambda i: (i, 0)),
                pl.BlockSpec((Hp, Hp), lambda i: (0, 0)),
                pl.BlockSpec((Hp, Hp), lambda i: (0, 0)),
                pl.BlockSpec((1, Hp), lambda i: (0, 0)),
            ],
            out_specs=pl.BlockSpec((rt, Hp), lambda i: (i, 0)),
        ),
        compiler_params=pltpu.CompilerParams(
            dimension_semantics=("parallel",)),
    )(xf, xb, wf, wb, b)


# ----------------------------------------------------------------------------
# Wrapper
# ----------------------------------------------------------------------------
def _pad_gates(w_t, b, H, Hp):
    """Pad (H, 3H) W^T / (3H,) bias per gate to (Hp, 3Hp) / (3Hp,) with zeros."""
    wp = jnp.zeros((Hp, 3 * Hp), jnp.float32)
    bp = jnp.zeros((3 * Hp,), jnp.float32)
    for g in range(3):
        wp = wp.at[:H, g * Hp:g * Hp + H].set(w_t[:, g * H:(g + 1) * H])
        bp = bp.at[g * Hp:g * Hp + H].set(b[g * H:(g + 1) * H])
    return wp, bp


def context_rnn_forward(params, input_seqs, input_lengths):
    """input_seqs: (T, B, M) int32, input_lengths: (B,) int32 (sorted desc)."""
    T, B, M = input_seqs.shape
    V, H = params["embedding"].shape
    Bp = _round_up(B, 8)       # sublane-aligned batch
    Hp = _round_up(H, 128)     # lane-dense hidden

    # ---- embedding gather + sum over memory axis (plain XLA gather; PAD row is zero) ----
    emb = params["embedding"][input_seqs].sum(axis=2)          # (T, B, H) f32
    # nn.Dropout is identity in eval mode (no-op here).

    # pad batch/hidden; padded lanes/rows stay exactly zero through the GRU.
    x_p = jnp.zeros((T, Bp, Hp), jnp.float32).at[:, :B, :H].set(emb)
    lens_p = jnp.zeros((Bp, 1), jnp.int32).at[:B, 0].set(input_lengths.astype(jnp.int32))

    # ---- per-gate padded GRU weights, staged as bf16 (biases stay f32) ----
    wih_f, bih_f = _pad_gates(params["w_ih_f"].T, params["b_ih_f"], H, Hp)
    whh_f, bhh_f = _pad_gates(params["w_hh_f"].T, params["b_hh_f"], H, Hp)
    wih_b, bih_b = _pad_gates(params["w_ih_b"].T, params["b_ih_b"], H, Hp)
    whh_b, bhh_b = _pad_gates(params["w_hh_b"].T, params["b_hh_b"], H, Hp)
    wih_s = jnp.stack([wih_f, wih_b]).astype(jnp.bfloat16)          # (2, Hp, 3Hp)
    whh_s = jnp.stack([whh_f, whh_b]).astype(jnp.bfloat16)          # (2, Hp, 3Hp)
    bih_s = jnp.stack([bih_f, bih_b])[:, None, :]                   # (2, 1, 3Hp) f32
    bhh_s = jnp.stack([bhh_f, bhh_b])[:, None, :]                   # (2, 1, 3Hp) f32

    # ---- bidirectional GRU: grid=(2,) over directions (parallel on v7x's 2 TCs) ----
    out_dir, hn = pl.pallas_call(
        bigru_kernel,
        out_shape=(jax.ShapeDtypeStruct((2, T, Bp, Hp), jnp.float32),
                   jax.ShapeDtypeStruct((2, Bp, Hp), jnp.float32)),
        grid_spec=pltpu.PrefetchScalarGridSpec(
            num_scalar_prefetch=0,
            grid=(2,),
            in_specs=[
                pl.BlockSpec((Bp, 1), lambda d: (0, 0)),                  # lengths
                pl.BlockSpec((T, Bp, Hp), lambda d: (0, 0, 0)),           # embedded x
                pl.BlockSpec((None, Hp, 3 * Hp), lambda d: (d, 0, 0)),    # W_ih
                pl.BlockSpec((None, Hp, 3 * Hp), lambda d: (d, 0, 0)),    # W_hh
                pl.BlockSpec((None, 1, 3 * Hp), lambda d: (d, 0, 0)),     # b_ih
                pl.BlockSpec((None, 1, 3 * Hp), lambda d: (d, 0, 0)),     # b_hh
            ],
            out_specs=[
                pl.BlockSpec((None, T, Bp, Hp), lambda d: (d, 0, 0, 0)),  # per-dir outputs
                pl.BlockSpec((None, Bp, Hp), lambda d: (d, 0, 0)),        # final hidden
            ],
            scratch_shapes=[pltpu.VMEM((T * Bp, 3 * Hp), jnp.float32)],   # hoisted gi
        ),
        compiler_params=pltpu.CompilerParams(
            dimension_semantics=("parallel",)),
    )(lens_p, x_p, wih_s, whh_s, bih_s, bhh_s)

    # ---- output projection W, split into fwd/bwd column halves (no 2H concat) ----
    Wt = params["W"].T                                            # (2H, H)
    wf_p = (jnp.zeros((Hp, Hp), jnp.float32)
            .at[:H, :H].set(Wt[:H]).astype(jnp.bfloat16))
    wb_p = (jnp.zeros((Hp, Hp), jnp.float32)
            .at[:H, :H].set(Wt[H:]).astype(jnp.bfloat16))
    b_p = jnp.zeros((1, Hp), jnp.float32).at[0, :H].set(params["b_W"])

    y_out = _project(out_dir[0].reshape(T * Bp, Hp),
                     out_dir[1].reshape(T * Bp, Hp), wf_p, wb_p, b_p)
    y_hid = _project(hn[0], hn[1], wf_p, wb_p, b_p)

    outputs = y_out.reshape(T, Bp, Hp)[:, :B, :H].transpose(1, 0, 2)   # (B, T, H)
    hidden = y_hid[:B, :H][None]                                       # (1, B, H)
    return outputs, hidden


# ----------------------------------------------------------------------------
# Pure-JAX f32 reference (for correctness check)
# ----------------------------------------------------------------------------
def ref_forward(params, input_seqs, input_lengths):
    T, B, M = input_seqs.shape
    V, H = params["embedding"].shape
    emb = params["embedding"][input_seqs].sum(axis=2)     # (T, B, H)
    lens = input_lengths.astype(jnp.int32)

    def run_dir(x_seq, times, wih, whh, bih, bhh):
        def step(h, inp):
            x, t = inp
            gi = x @ wih + bih
            gh = h @ whh + bhh
            r = jax.nn.sigmoid(gi[:, :H] + gh[:, :H])
            z = jax.nn.sigmoid(gi[:, H:2 * H] + gh[:, H:2 * H])
            n = jnp.tanh(gi[:, 2 * H:] + r * gh[:, 2 * H:])
            h_new = (1.0 - z) * n + z * h
            m = (t < lens)[:, None].astype(jnp.float32)
            h2 = m * h_new + (1.0 - m) * h
            return h2, m * h2
        h0 = jnp.zeros((B, H), jnp.float32)
        hT, outs = jax.lax.scan(step, h0, (x_seq, times))
        return outs, hT

    t_fwd = jnp.arange(T)
    out_f, h_f = run_dir(emb, t_fwd, params["w_ih_f"].T, params["w_hh_f"].T,
                         params["b_ih_f"], params["b_hh_f"])
    out_b_rev, h_b = run_dir(emb[::-1], t_fwd[::-1], params["w_ih_b"].T,
                             params["w_hh_b"].T, params["b_ih_b"], params["b_hh_b"])
    out_b = out_b_rev[::-1]
    outputs = jnp.concatenate([out_f, out_b], axis=-1)            # (T, B, 2H)
    hidden = jnp.concatenate([h_f, h_b], axis=-1)                 # (B, 2H)
    outputs = outputs @ params["W"].T + params["b_W"]
    hidden = hidden @ params["W"].T + params["b_W"]
    return outputs.transpose(1, 0, 2), hidden[None]


# ----------------------------------------------------------------------------
def make_params(key, vocab, hidden):
    ks = jax.random.split(key, 12)
    bound = 1.0 / math.sqrt(hidden)
    u = lambda k, shape: jax.random.uniform(k, shape, jnp.float32, -bound, bound)
    emb = u(ks[0], (vocab, hidden)).at[PAD_token].set(0.0)  # padding_idx row = 0
    return {
        "embedding": emb,
        "w_ih_f": u(ks[1], (3 * hidden, hidden)),
        "w_hh_f": u(ks[2], (3 * hidden, hidden)),
        "b_ih_f": u(ks[3], (3 * hidden,)),
        "b_hh_f": u(ks[4], (3 * hidden,)),
        "w_ih_b": u(ks[5], (3 * hidden, hidden)),
        "w_hh_b": u(ks[6], (3 * hidden, hidden)),
        "b_ih_b": u(ks[7], (3 * hidden,)),
        "b_hh_b": u(ks[8], (3 * hidden,)),
        "W": u(ks[9], (hidden, 2 * hidden)),
        "b_W": u(ks[10], (hidden,)),
    }


if __name__ == "__main__":
    T, B, M = 8, 4, 4        # max_len, batch, memory_size
    V, H = 32, 32            # input_size (vocab), hidden_size

    key = jax.random.PRNGKey(0)
    k_par, k_seq = jax.random.split(key)
    params = make_params(k_par, V, H)

    input_seqs = jax.random.randint(k_seq, (T, B, M), 0, V, dtype=jnp.int32)
    input_lengths = jnp.array([8, 7, 5, 3], dtype=jnp.int32)  # sorted descending
    # pad positions beyond each length with PAD_token (as pack_padded implies)
    t_idx = jnp.arange(T)[:, None, None]
    input_seqs = jnp.where(t_idx < input_lengths[None, :, None], input_seqs, PAD_token)

    outputs, hidden = context_rnn_forward(params, input_seqs, input_lengths)
    outputs = jax.block_until_ready(outputs)
    hidden = jax.block_until_ready(hidden)

    ref_out, ref_hid = ref_forward(params, input_seqs, input_lengths)
    # bf16 MXU matmuls vs f32 reference -> loosened tolerance
    np.testing.assert_allclose(np.asarray(outputs), np.asarray(ref_out),
                               rtol=2e-2, atol=2e-2)
    np.testing.assert_allclose(np.asarray(hidden), np.asarray(ref_hid),
                               rtol=2e-2, atol=2e-2)

    assert outputs.shape == (B, T, H) and hidden.shape == (1, B, H)
    print("KERNEL_OK")
</pallas_src>

<mosaic_0001>
module attributes {stable_mosaic.version = 11 : i64} {
  func.func @bigru_kernel(%arg0: i32, %arg1: memref<8x1xi32, #tpu.memory_space<vmem>>, %arg2: memref<8x8x128xf32, #tpu.memory_space<vmem>>, %arg3: memref<1x128x384xbf16, #tpu.memory_space<vmem>>, %arg4: memref<1x128x384xbf16, #tpu.memory_space<vmem>>, %arg5: memref<1x1x384xf32, #tpu.memory_space<vmem>>, %arg6: memref<1x1x384xf32, #tpu.memory_space<vmem>>, %arg7: memref<1x8x8x128xf32, #tpu.memory_space<vmem>>, %arg8: memref<1x8x128xf32, #tpu.memory_space<vmem>>, %arg9: memref<64x384xf32, #tpu.memory_space<vmem>>) attributes {dimension_semantics = [#tpu.dimension_semantics<parallel>], iteration_bounds = array<i64: 2>, scalar_prefetch = 0 : i64, scratch_operands = 1 : i64, tpu.core_type = #tpu.core_type<tc>, window_params = [{pipeline_mode = #tpu.pipeline_mode<synchronous>, transform_indices = @transform_0, window_bounds = array<i64: 8, 1>}, {pipeline_mode = #tpu.pipeline_mode<synchronous>, transform_indices = @transform_1, window_bounds = array<i64: 8, 8, 128>}, {transform_indices = @transform_2, window_bounds = array<i64: 1, 128, 384>}, {transform_indices = @transform_3, window_bounds = array<i64: 1, 128, 384>}, {transform_indices = @transform_4, window_bounds = array<i64: 1, 1, 384>}, {transform_indices = @transform_5, window_bounds = array<i64: 1, 1, 384>}, {transform_indices = @transform_6, window_bounds = array<i64: 1, 8, 8, 128>}, {transform_indices = @transform_7, window_bounds = array<i64: 1, 8, 128>}]} {
    %c0 = arith.constant 0 : index
    %c0_0 = arith.constant 0 : index
    %c0_1 = arith.constant 0 : index
    %0 = vector.load %arg2[%c0, %c0_0, %c0_1] : memref<8x8x128xf32, #tpu.memory_space<vmem>>, vector<8x8x128xf32>
    %1 = vector.shape_cast %0 : vector<8x8x128xf32> to vector<64x128xf32>
    %2 = arith.truncf %1 : vector<64x128xf32> to vector<64x128xbf16>
    %c0_2 = arith.constant 0 : index
    %c0_3 = arith.constant 0 : index
    %c0_4 = arith.constant 0 : index
    %3 = vector.load %arg3[%c0_2, %c0_3, %c0_4] : memref<1x128x384xbf16, #tpu.memory_space<vmem>>, vector<1x128x384xbf16>
    %4 = vector.shape_cast %3 : vector<1x128x384xbf16> to vector<128x384xbf16>
    %cst = arith.constant dense<0.000000e+00> : vector<64x384xf32>
    %5 = tpu.matmul %2, %4, %cst {dimension_numbers = #tpu.dot_dimension_numbers<[1], [0], [0], [1], [0, 0, 1, 1], [], []>} : vector<64x128xbf16>, vector<128x384xbf16>, vector<64x384xf32> -> vector<64x384xf32>
    %c0_5 = arith.constant 0 : index
    %c0_6 = arith.constant 0 : index
    %c0_7 = arith.constant 0 : index
    %6 = vector.load %arg5[%c0_5, %c0_6, %c0_7] : memref<1x1x384xf32, #tpu.memory_space<vmem>>, vector<1x1x384xf32>
    %7 = vector.shape_cast %6 : vector<1x1x384xf32> to vector<1x384xf32>
    %8 = vector.broadcast %7 : vector<1x384xf32> to vector<64x384xf32>
    %9 = arith.addf %5, %8 : vector<64x384xf32>
    %c0_8 = arith.constant 0 : index
    %c0_9 = arith.constant 0 : index
    %10 = vector.load %arg9[%c0_8, %c0_9] : memref<64x384xf32, #tpu.memory_space<vmem>>, vector<64x384xf32>
    tpu.vector_store %arg9[%c0_8, %c0_9], %9 {strides = array<i32>} : memref<64x384xf32, #tpu.memory_space<vmem>>, vector<64x384xf32>,
    %c0_10 = arith.constant 0 : index
    %c0_11 = arith.constant 0 : index
    %c0_12 = arith.constant 0 : index
    %11 = vector.load %arg4[%c0_10, %c0_11, %c0_12] : memref<1x128x384xbf16, #tpu.memory_space<vmem>>, vector<1x128x384xbf16>
    %12 = vector.shape_cast %11 : vector<1x128x384xbf16> to vector<128x384xbf16>
    %c0_13 = arith.constant 0 : index
    %c0_14 = arith.constant 0 : index
    %c0_15 = arith.constant 0 : index
    %13 = vector.load %arg6[%c0_13, %c0_14, %c0_15] : memref<1x1x384xf32, #tpu.memory_space<vmem>>, vector<1x1x384xf32>
    %14 = vector.shape_cast %13 : vector<1x1x384xf32> to vector<1x384xf32>
    %c0_16 = arith.constant 0 : index
    %c0_17 = arith.constant 0 : index
    %15 = vector.load %arg1[%c0_16, %c0_17] : memref<8x1xi32, #tpu.memory_space<vmem>>, vector<8x1xi32>
    %cst_18 = arith.constant 0.000000e+00 : f32
    %16 = vector.broadcast %cst_18 : f32 to vector<8x128xf32>
    %c0_i32 = arith.constant 0 : i32
    %c1_i32 = arith.constant 1 : i32
    %17 = arith.subi %c1_i32, %arg0 : i32
    %18 = arith.muli %17, %c0_i32 : i32
    %c7_i32 = arith.constant 7 : i32
    %19 = arith.subi %c7_i32, %c0_i32 : i32
    %20 = arith.muli %arg0, %19 : i32
    %21 = arith.addi %18, %20 : i32
    %c8_i32 = arith.constant 8 : i32
    %22 = arith.muli %21, %c8_i32 : i32
    %23 = tpu.assume_multiple %22, 8 : i32
    %24 = arith.index_cast %23 : i32 to index
    %c0_19 = arith.constant 0 : index
    %25 = vector.load %arg9[%24, %c0_19] : memref<64x384xf32, #tpu.memory_space<vmem>>, vector<8x384xf32>
    %26 = arith.truncf %16 : vector<8x128xf32> to vector<8x128xbf16>
    %cst_20 = arith.constant dense<0.000000e+00> : vector<8x384xf32>
    %27 = tpu.matmul %26, %12, %cst_20 {dimension_numbers = #tpu.dot_dimension_numbers<[1], [0], [0], [1], [0, 0, 1, 1], [], []>} : vector<8x128xbf16>, vector<128x384xbf16>, vector<8x384xf32> -> vector<8x384xf32>
    %28 = vector.broadcast %14 : vector<1x384xf32> to vector<8x384xf32>
    %29 = arith.addf %27, %28 : vector<8x384xf32>
    %30 = vector.extract_strided_slice %25 {offsets = [0, 0], sizes = [8, 128], strides = [1, 1]} : vector<8x384xf32> to vector<8x128xf32>
    %31 = vector.extract_strided_slice %29 {offsets = [0, 0], sizes = [8, 128], strides = [1, 1]} : vector<8x384xf32> to vector<8x128xf32>
    %32 = arith.addf %30, %31 : vector<8x128xf32>
    %33 = arith.negf %32 : vector<8x128xf32>
    %34 = math.exp %33 : vector<8x128xf32>
    %cst_21 = arith.constant 1.000000e+00 : f32
    %35 = vector.broadcast %cst_21 : f32 to vector<8x128xf32>
    %36 = arith.addf %35, %34 : vector<8x128xf32>
    %37 = arith.divf %35, %36 : vector<8x128xf32>
    %38 = vector.extract_strided_slice %25 {offsets = [0, 128], sizes = [8, 128], strides = [1, 1]} : vector<8x384xf32> to vector<8x128xf32>
    %39 = vector.extract_strided_slice %29 {offsets = [0, 128], sizes = [8, 128], strides = [1, 1]} : vector<8x384xf32> to vector<8x128xf32>
    %40 = arith.addf %38, %39 : vector<8x128xf32>
    %41 = arith.negf %40 : vector<8x128xf32>
    %42 = math.exp %41 : vector<8x128xf32>
    %cst_22 = arith.constant 1.000000e+00 : f32
    %43 = vector.broadcast %cst_22 : f32 to vector<8x128xf32>
    %44 = arith.addf %43, %42 : vector<8x128xf32>
    %45 = arith.divf %43, %44 : vector<8x128xf32>
    %46 = vector.extract_strided_slice %25 {offsets = [0, 256], sizes = [8, 128], strides = [1, 1]} : vector<8x384xf32> to vector<8x128xf32>
    %47 = vector.extract_strided_slice %29 {offsets = [0, 256], sizes = [8, 128], strides = [1, 1]} : vector<8x384xf32> to vector<8x128xf32>
    %48 = arith.mulf %37, %47 : vector<8x128xf32>
    %49 = arith.addf %46, %48 : vector<8x128xf32>
    %50 = math.tanh %49 : vector<8x128xf32>
    %cst_23 = arith.constant 1.000000e+00 : f32
    %51 = vector.broadcast %cst_23 : f32 to vector<8x128xf32>
    %52 = arith.subf %51, %45 : vector<8x128xf32>
    %53 = arith.mulf %52, %50 : vector<8x128xf32>
    %54 = arith.mulf %45, %16 : vector<8x128xf32>
    %55 = arith.addf %53, %54 : vector<8x128xf32>
    %56 = vector.broadcast %21 : i32 to vector<8x1xi32>
    %57 = arith.cmpi slt, %56, %15 : vector<8x1xi32>
    %58 = vector.shape_cast %57 : vector<8x1xi1> to vector<8x1xi1>
    %59 = vector.broadcast %58 : vector<8x1xi1> to vector<8x128xi1>
    %60 = arith.select %59, %55, %16 : vector<8x128xi1>, vector<8x128xf32>
    %cst_24 = arith.constant 0.000000e+00 : f32
    %61 = vector.shape_cast %57 : vector<8x1xi1> to vector<8x1xi1>
    %62 = vector.broadcast %61 : vector<8x1xi1> to vector<8x128xi1>
    %63 = vector.broadcast %cst_24 : f32 to vector<8x128xf32>
    %64 = arith.select %62, %60, %63 : vector<8x128xi1>, vector<8x128xf32>
    %65 = vector.shape_cast %64 : vector<8x128xf32> to vector<1x8x128xf32>
    %c0_25 = arith.constant 0 : index
    %66 = arith.index_cast %21 : i32 to index
    %c0_26 = arith.constant 0 : index
    %c0_27 = arith.constant 0 : index
    %67 = vector.load %arg7[%c0_25, %66, %c0_26, %c0_27] : memref<1x8x8x128xf32, #tpu.memory_space<vmem>>, vector<1x1x8x128xf32>
    %68 = vector.shape_cast %67 : vector<1x1x8x128xf32> to vector<1x8x128xf32>
    %69 = vector.shape_cast %65 : vector<1x8x128xf32> to vector<1x1x8x128xf32>
    tpu.vector_store %arg7[%c0_25, %66, %c0_26, %c0_27], %69 {strides = array<i32>} : memref<1x8x8x128xf32, #tpu.memory_space<vmem>>, vector<1x1x8x128xf32>,
    %c1_i32_28 = arith.constant 1 : i32
    %c1_i32_29 = arith.constant 1 : i32
    %70 = arith.subi %c1_i32_29, %arg0 : i32
    %71 = arith.muli %70, %c1_i32_28 : i32
    %c7_i32_30 = arith.constant 7 : i32
    %72 = arith.subi %c7_i32_30, %c1_i32_28 : i32
    %73 = arith.muli %arg0, %72 : i32
    %74 = arith.addi %71, %73 : i32
    %c8_i32_31 = arith.constant 8 : i32
    %75 = arith.muli %74, %c8_i32_31 : i32
    %76 = tpu.assume_multiple %75, 8 : i32
    %77 = arith.index_cast %76 : i32 to index
    %c0_32 = arith.constant 0 : index
    %78 = vector.load %arg9[%77, %c0_32] : memref<64x384xf32, #tpu.memory_space<vmem>>, vector<8x384xf32>
    %79 = arith.truncf %60 : vector<8x128xf32> to vector<8x128xbf16>
    %cst_33 = arith.constant dense<0.000000e+00> : vector<8x384xf32>
    %80 = tpu.matmul %79, %12, %cst_33 {dimension_numbers = #tpu.dot_dimension_numbers<[1], [0], [0], [1], [0, 0, 1, 1], [], []>} : vector<8x128xbf16>, vector<128x384xbf16>, vector<8x384xf32> -> vector<8x384xf32>
    %81 = vector.broadcast %14 : vector<1x384xf32> to vector<8x384xf32>
    %82 = arith.addf %80, %81 : vector<8x384xf32>
    %83 = vector.extract_strided_slice %78 {offsets = [0, 0], sizes = [8, 128], strides = [1, 1]} : vector<8x384xf32> to vector<8x128xf32>
    %84 = vector.extract_strided_slice %82 {offsets = [0, 0], sizes = [8, 128], strides = [1, 1]} : vector<8x384xf32> to vector<8x128xf32>
    %85 = arith.addf %83, %84 : vector<8x128xf32>
    %86 = arith.negf %85 : vector<8x128xf32>
    %87 = math.exp %86 : vector<8x128xf32>
    %cst_34 = arith.constant 1.000000e+00 : f32
    %88 = vector.broadcast %cst_34 : f32 to vector<8x128xf32>
    %89 = arith.addf %88, %87 : vector<8x128xf32>
    %90 = arith.divf %88, %89 : vector<8x128xf32>
    %91 = vector.extract_strided_slice %78 {offsets = [0, 128], sizes = [8, 128], strides = [1, 1]} : vector<8x384xf32> to vector<8x128xf32>
    %92 = vector.extract_strided_slice %82 {offsets = [0, 128], sizes = [8, 128], strides = [1, 1]} : vector<8x384xf32> to vector<8x128xf32>
    %93 = arith.addf %91, %92 : vector<8x128xf32>
    %94 = arith.negf %93 : vector<8x128xf32>
    %95 = math.exp %94 : vector<8x128xf32>
    %cst_35 = arith.constant 1.000000e+00 : f32
    %96 = vector.broadcast %cst_35 : f32 to vector<8x128xf32>
    %97 = arith.addf %96, %95 : vector<8x128xf32>
    %98 = arith.divf %96, %97 : vector<8x128xf32>
    %99 = vector.extract_strided_slice %78 {offsets = [0, 256], sizes = [8, 128], strides = [1, 1]} : vector<8x384xf32> to vector<8x128xf32>
    %100 = vector.extract_strided_slice %82 {offsets = [0, 256], sizes = [8, 128], strides = [1, 1]} : vector<8x384xf32> to vector<8x128xf32>
    %101 = arith.mulf %90, %100 : vector<8x128xf32>
    %102 = arith.addf %99, %101 : vector<8x128xf32>
    %103 = math.tanh %102 : vector<8x128xf32>
    %cst_36 = arith.constant 1.000000e+00 : f32
    %104 = vector.broadcast %cst_36 : f32 to vector<8x128xf32>
    %105 = arith.subf %104, %98 : vector<8x128xf32>
    %106 = arith.mulf %105, %103 : vector<8x128xf32>
    %107 = arith.mulf %98, %60 : vector<8x128xf32>
    %108 = arith.addf %106, %107 : vector<8x128xf32>
    %109 = vector.broadcast %74 : i32 to vector<8x1xi32>
    %110 = arith.cmpi slt, %109, %15 : vector<8x1xi32>
    %111 = vector.shape_cast %110 : vector<8x1xi1> to vector<8x1xi1>
    %112 = vector.broadcast %111 : vector<8x1xi1> to vector<8x128xi1>
    %113 = arith.select %112, %108, %60 : vector<8x128xi1>, vector<8x128xf32>
    %cst_37 = arith.constant 0.000000e+00 : f32
    %114 = vector.shape_cast %110 : vector<8x1xi1> to vector<8x1xi1>
    %115 = vector.broadcast %114 : vector<8x1xi1> to vector<8x128xi1>
    %116 = vector.broadcast %cst_37 : f32 to vector<8x128xf32>
    %117 = arith.select %115, %113, %116 : vector<8x128xi1>, vector<8x128xf32>
    %118 = vector.shape_cast %117 : vector<8x128xf32> to vector<1x8x128xf32>
    %c0_38 = arith.constant 0 : index
    %119 = arith.index_cast %74 : i32 to index
    %c0_39 = arith.constant 0 : index
    %c0_40 = arith.constant 0 : index
    %120 = vector.load %arg7[%c0_38, %119, %c0_39, %c0_40] : memref<1x8x8x128xf32, #tpu.memory_space<vmem>>, vector<1x1x8x128xf32>
    %121 = vector.shape_cast %120 : vector<1x1x8x128xf32> to vector<1x8x128xf32>
    %122 = vector.shape_cast %118 : vector<1x8x128xf32> to vector<1x1x8x128xf32>
    tpu.vector_store %arg7[%c0_38, %119, %c0_39, %c0_40], %122 {strides = array<i32>} : memref<1x8x8x128xf32, #tpu.memory_space<vmem>>, vector<1x1x8x128xf32>,
    %c2_i32 = arith.constant 2 : i32
    %c1_i32_41 = arith.constant 1 : i32
    %123 = arith.subi %c1_i32_41, %arg0 : i32
    %124 = arith.muli %123, %c2_i32 : i32
    %c7_i32_42 = arith.constant 7 : i32
    %125 = arith.subi %c7_i32_42, %c2_i32 : i32
    %126 = arith.muli %arg0, %125 : i32
    %127 = arith.addi %124, %126 : i32
    %c8_i32_43 = arith.constant 8 : i32
    %128 = arith.muli %127, %c8_i32_43 : i32
    %129 = tpu.assume_multiple %128, 8 : i32
    %130 = arith.index_cast %129 : i32 to index
    %c0_44 = arith.constant 0 : index
    %131 = vector.load %arg9[%130, %c0_44] : memref<64x384xf32, #tpu.memory_space<vmem>>, vector<8x384xf32>
    %132 = arith.truncf %113 : vector<8x128xf32> to vector<8x128xbf16>
    %cst_45 = arith.constant dense<0.000000e+00> : vector<8x384xf32>
    %133 = tpu.matmul %132, %12, %cst_45 {dimension_numbers = #tpu.dot_dimension_numbers<[1], [0], [0], [1], [0, 0, 1, 1], [], []>} : vector<8x128xbf16>, vector<128x384xbf16>, vector<8x384xf32> -> vector<8x384xf32>
    %134 = vector.broadcast %14 : vector<1x384xf32> to vector<8x384xf32>
    %135 = arith.addf %133, %134 : vector<8x384xf32>
    %136 = vector.extract_strided_slice %131 {offsets = [0, 0], sizes = [8, 128], strides = [1, 1]} : vector<8x384xf32> to vector<8x128xf32>
    %137 = vector.extract_strided_slice %135 {offsets = [0, 0], sizes = [8, 128], strides = [1, 1]} : vector<8x384xf32> to vector<8x128xf32>
    %138 = arith.addf %136, %137 : vector<8x128xf32>
    %139 = arith.negf %138 : vector<8x128xf32>
    %140 = math.exp %139 : vector<8x128xf32>
    %cst_46 = arith.constant 1.000000e+00 : f32
    %141 = vector.broadcast %cst_46 : f32 to vector<8x128xf32>
    %142 = arith.addf %141, %140 : vector<8x128xf32>
    %143 = arith.divf %141, %142 : vector<8x128xf32>
    %144 = vector.extract_strided_slice %131 {offsets = [0, 128], sizes = [8, 128], strides = [1, 1]} : vector<8x384xf32> to vector<8x128xf32>
    %145 = vector.extract_strided_slice %135 {offsets = [0, 128], sizes = [8, 128], strides = [1, 1]} : vector<8x384xf32> to vector<8x128xf32>
    %146 = arith.addf %144, %145 : vector<8x128xf32>
    %147 = arith.negf %146 : vector<8x128xf32>
    %148 = math.exp %147 : vector<8x128xf32>
    %cst_47 = arith.constant 1.000000e+00 : f32
    %149 = vector.broadcast %cst_47 : f32 to vector<8x128xf32>
    %150 = arith.addf %149, %148 : vector<8x128xf32>
    %151 = arith.divf %149, %150 : vector<8x128xf32>
    %152 = vector.extract_strided_slice %131 {offsets = [0, 256], sizes = [8, 128], strides = [1, 1]} : vector<8x384xf32> to vector<8x128xf32>
    %153 = vector.extract_strided_slice %135 {offsets = [0, 256], sizes = [8, 128], strides = [1, 1]} : vector<8x384xf32> to vector<8x128xf32>
    %154 = arith.mulf %143, %153 : vector<8x128xf32>
    %155 = arith.addf %152, %154 : vector<8x128xf32>
    %156 = math.tanh %155 : vector<8x128xf32>
    %cst_48 = arith.constant 1.000000e+00 : f32
    %157 = vector.broadcast %cst_48 : f32 to vector<8x128xf32>
    %158 = arith.subf %157, %151 : vector<8x128xf32>
    %159 = arith.mulf %158, %156 : vector<8x128xf32>
    %160 = arith.mulf %151, %113 : vector<8x128xf32>
    %161 = arith.addf %159, %160 : vector<8x128xf32>
    %162 = vector.broadcast %127 : i32 to vector<8x1xi32>
    %163 = arith.cmpi slt, %162, %15 : vector<8x1xi32>
    %164 = vector.shape_cast %163 : vector<8x1xi1> to vector<8x1xi1>
    %165 = vector.broadcast %164 : vector<8x1xi1> to vector<8x128xi1>
    %166 = arith.select %165, %161, %113 : vector<8x128xi1>, vector<8x128xf32>
    %cst_49 = arith.constant 0.000000e+00 : f32
    %167 = vector.shape_cast %163 : vector<8x1xi1> to vector<8x1xi1>
    %168 = vector.broadcast %167 : vector<8x1xi1> to vector<8x128xi1>
    %169 = vector.broadcast %cst_49 : f32 to vector<8x128xf32>
    %170 = arith.select %168, %166, %169 : vector<8x128xi1>, vector<8x128xf32>
    %171 = vector.shape_cast %170 : vector<8x128xf32> to vector<1x8x128xf32>
    %c0_50 = arith.constant 0 : index
    %172 = arith.index_cast %127 : i32 to index
    %c0_51 = arith.constant 0 : index
    %c0_52 = arith.constant 0 : index
    %173 = vector.load %arg7[%c0_50, %172, %c0_51, %c0_52] : memref<1x8x8x128xf32, #tpu.memory_space<vmem>>, vector<1x1x8x128xf32>
    %174 = vector.shape_cast %173 : vector<1x1x8x128xf32> to vector<1x8x128xf32>
    %175 = vector.shape_cast %171 : vector<1x8x128xf32> to vector<1x1x8x128xf32>
    tpu.vector_store %arg7[%c0_50, %172, %c0_51, %c0_52], %175 {strides = array<i32>} : memref<1x8x8x128xf32, #tpu.memory_space<vmem>>, vector<1x1x8x128xf32>,
    %c3_i32 = arith.constant 3 : i32
    %c1_i32_53 = arith.constant 1 : i32
    %176 = arith.subi %c1_i32_53, %arg0 : i32
    %177 = arith.muli %176, %c3_i32 : i32
    %c7_i32_54 = arith.constant 7 : i32
    %178 = arith.subi %c7_i32_54, %c3_i32 : i32
    %179 = arith.muli %arg0, %178 : i32
    %180 = arith.addi %177, %179 : i32
    %c8_i32_55 = arith.constant 8 : i32
    %181 = arith.muli %180, %c8_i32_55 : i32
    %182 = tpu.assume_multiple %181, 8 : i32
    %183 = arith.index_cast %182 : i32 to index
    %c0_56 = arith.constant 0 : index
    %184 = vector.load %arg9[%183, %c0_56] : memref<64x384xf32, #tpu.memory_space<vmem>>, vector<8x384xf32>
    %185 = arith.truncf %166 : vector<8x128xf32> to vector<8x128xbf16>
    %cst_57 = arith.constant dense<0.000000e+00> : vector<8x384xf32>
    %186 = tpu.matmul %185, %12, %cst_57 {dimension_numbers = #tpu.dot_dimension_numbers<[1], [0], [0], [1], [0, 0, 1, 1], [], []>} : vector<8x128xbf16>, vector<128x384xbf16>, vector<8x384xf32> -> vector<8x384xf32>
    %187 = vector.broadcast %14 : vector<1x384xf32> to vector<8x384xf32>
    %188 = arith.addf %186, %187 : vector<8x384xf32>
    %189 = vector.extract_strided_slice %184 {offsets = [0, 0], sizes = [8, 128], strides = [1, 1]} : vector<8x384xf32> to vector<8x128xf32>
    %190 = vector.extract_strided_slice %188 {offsets = [0, 0], sizes = [8, 128], strides = [1, 1]} : vector<8x384xf32> to vector<8x128xf32>
    %191 = arith.addf %189, %190 : vector<8x128xf32>
    %192 = arith.negf %191 : vector<8x128xf32>
    %193 = math.exp %192 : vector<8x128xf32>
    %cst_58 = arith.constant 1.000000e+00 : f32
    %194 = vector.broadcast %cst_58 : f32 to vector<8x128xf32>
    %195 = arith.addf %194, %193 : vector<8x128xf32>
    %196 = arith.divf %194, %195 : vector<8x128xf32>
    %197 = vector.extract_strided_slice %184 {offsets = [0, 128], sizes = [8, 128], strides = [1, 1]} : vector<8x384xf32> to vector<8x128xf32>
    %198 = vector.extract_strided_slice %188 {offsets = [0, 128], sizes = [8, 128], strides = [1, 1]} : vector<8x384xf32> to vector<8x128xf32>
    %199 = arith.addf %197, %198 : vector<8x128xf32>
    %200 = arith.negf %199 : vector<8x128xf32>
    %201 = math.exp %200 : vector<8x128xf32>
    %cst_59 = arith.constant 1.000000e+00 : f32
    %202 = vector.broadcast %cst_59 : f32 to vector<8x128xf32>
    %203 = arith.addf %202, %201 : vector<8x128xf32>
    %204 = arith.divf %202, %203 : vector<8x128xf32>
    %205 = vector.extract_strided_slice %184 {offsets = [0, 256], sizes = [8, 128], strides = [1, 1]} : vector<8x384xf32> to vector<8x128xf32>
    %206 = vector.extract_strided_slice %188 {offsets = [0, 256], sizes = [8, 128], strides = [1, 1]} : vector<8x384xf32> to vector<8x128xf32>
    %207 = arith.mulf %196, %206 : vector<8x128xf32>
    %208 = arith.addf %205, %207 : vector<8x128xf32>
    %209 = math.tanh %208 : vector<8x128xf32>
    %cst_60 = arith.constant 1.000000e+00 : f32
    %210 = vector.broadcast %cst_60 : f32 to vector<8x128xf32>
    %211 = arith.subf %210, %204 : vector<8x128xf32>
    %212 = arith.mulf %211, %209 : vector<8x128xf32>
    %213 = arith.mulf %204, %166 : vector<8x128xf32>
    %214 = arith.addf %212, %213 : vector<8x128xf32>
    %215 = vector.broadcast %180 : i32 to vector<8x1xi32>
    %216 = arith.cmpi slt, %215, %15 : vector<8x1xi32>
    %217 = vector.shape_cast %216 : vector<8x1xi1> to vector<8x1xi1>
    %218 = vector.broadcast %217 : vector<8x1xi1> to vector<8x128xi1>
    %219 = arith.select %218, %214, %166 : vector<8x128xi1>, vector<8x128xf32>
    %cst_61 = arith.constant 0.000000e+00 : f32
    %220 = vector.shape_cast %216 : vector<8x1xi1> to vector<8x1xi1>
    %221 = vector.broadcast %220 : vector<8x1xi1> to vector<8x128xi1>
    %222 = vector.broadcast %cst_61 : f32 to vector<8x128xf32>
    %223 = arith.select %221, %219, %222 : vector<8x128xi1>, vector<8x128xf32>
    %224 = vector.shape_cast %223 : vector<8x128xf32> to vector<1x8x128xf32>
    %c0_62 = arith.constant 0 : index
    %225 = arith.index_cast %180 : i32 to index
    %c0_63 = arith.constant 0 : index
    %c0_64 = arith.constant 0 : index
    %226 = vector.load %arg7[%c0_62, %225, %c0_63, %c0_64] : memref<1x8x8x128xf32, #tpu.memory_space<vmem>>, vector<1x1x8x128xf32>
    %227 = vector.shape_cast %226 : vector<1x1x8x128xf32> to vector<1x8x128xf32>
    %228 = vector.shape_cast %224 : vector<1x8x128xf32> to vector<1x1x8x128xf32>
    tpu.vector_store %arg7[%c0_62, %225, %c0_63, %c0_64], %228 {strides = array<i32>} : memref<1x8x8x128xf32, #tpu.memory_space<vmem>>, vector<1x1x8x128xf32>,
    %c4_i32 = arith.constant 4 : i32
    %c1_i32_65 = arith.constant 1 : i32
    %229 = arith.subi %c1_i32_65, %arg0 : i32
    %230 = arith.muli %229, %c4_i32 : i32
    %c7_i32_66 = arith.constant 7 : i32
    %231 = arith.subi %c7_i32_66, %c4_i32 : i32
    %232 = arith.muli %arg0, %231 : i32
    %233 = arith.addi %230, %232 : i32
    %c8_i32_67 = arith.constant 8 : i32
    %234 = arith.muli %233, %c8_i32_67 : i32
    %235 = tpu.assume_multiple %234, 8 : i32
    %236 = arith.index_cast %235 : i32 to index
    %c0_68 = arith.constant 0 : index
    %237 = vector.load %arg9[%236, %c0_68] : memref<64x384xf32, #tpu.memory_space<vmem>>, vector<8x384xf32>
    %238 = arith.truncf %219 : vector<8x128xf32> to vector<8x128xbf16>
    %cst_69 = arith.constant dense<0.000000e+00> : vector<8x384xf32>
    %239 = tpu.matmul %238, %12, %cst_69 {dimension_numbers = #tpu.dot_dimension_numbers<[1], [0], [0], [1], [0, 0, 1, 1], [], []>} : vector<8x128xbf16>, vector<128x384xbf16>, vector<8x384xf32> -> vector<8x384xf32>
    %240 = vector.broadcast %14 : vector<1x384xf32> to vector<8x384xf32>
    %241 = arith.addf %239, %240 : vector<8x384xf32>
    %242 = vector.extract_strided_slice %237 {offsets = [0, 0], sizes = [8, 128], strides = [1, 1]} : vector<8x384xf32> to vector<8x128xf32>
    %243 = vector.extract_strided_slice %241 {offsets = [0, 0], sizes = [8, 128], strides = [1, 1]} : vector<8x384xf32> to vector<8x128xf32>
    %244 = arith.addf %242, %243 : vector<8x128xf32>
    %245 = arith.negf %244 : vector<8x128xf32>
    %246 = math.exp %245 : vector<8x128xf32>
    %cst_70 = arith.constant 1.000000e+00 : f32
    %247 = vector.broadcast %cst_70 : f32 to vector<8x128xf32>
    %248 = arith.addf %247, %246 : vector<8x128xf32>
    %249 = arith.divf %247, %248 : vector<8x128xf32>
    %250 = vector.extract_strided_slice %237 {offsets = [0, 128], sizes = [8, 128], strides = [1, 1]} : vector<8x384xf32> to vector<8x128xf32>
    %251 = vector.extract_strided_slice %241 {offsets = [0, 128], sizes = [8, 128], strides = [1, 1]} : vector<8x384xf32> to vector<8x128xf32>
    %252 = arith.addf %250, %251 : vector<8x128xf32>
    %253 = arith.negf %252 : vector<8x128xf32>
    %254 = math.exp %253 : vector<8x128xf32>
    %cst_71 = arith.constant 1.000000e+00 : f32
    %255 = vector.broadcast %cst_71 : f32 to vector<8x128xf32>
    %256 = arith.addf %255, %254 : vector<8x128xf32>
    %257 = arith.divf %255, %256 : vector<8x128xf32>
    %258 = vector.extract_strided_slice %237 {offsets = [0, 256], sizes = [8, 128], strides = [1, 1]} : vector<8x384xf32> to vector<8x128xf32>
    %259 = vector.extract_strided_slice %241 {offsets = [0, 256], sizes = [8, 128], strides = [1, 1]} : vector<8x384xf32> to vector<8x128xf32>
    %260 = arith.mulf %249, %259 : vector<8x128xf32>
    %261 = arith.addf %258, %260 : vector<8x128xf32>
    %262 = math.tanh %261 : vector<8x128xf32>
    %cst_72 = arith.constant 1.000000e+00 : f32
    %263 = vector.broadcast %cst_72 : f32 to vector<8x128xf32>
    %264 = arith.subf %263, %257 : vector<8x128xf32>
    %265 = arith.mulf %264, %262 : vector<8x128xf32>
    %266 = arith.mulf %257, %219 : vector<8x128xf32>
    %267 = arith.addf %265, %266 : vector<8x128xf32>
    %268 = vector.broadcast %233 : i32 to vector<8x1xi32>
    %269 = arith.cmpi slt, %268, %15 : vector<8x1xi32>
    %270 = vector.shape_cast %269 : vector<8x1xi1> to vector<8x1xi1>
    %271 = vector.broadcast %270 : vector<8x1xi1> to vector<8x128xi1>
    %272 = arith.select %271, %267, %219 : vector<8x128xi1>, vector<8x128xf32>
    %cst_73 = arith.constant 0.000000e+00 : f32
    %273 = vector.shape_cast %269 : vector<8x1xi1> to vector<8x1xi1>
    %274 = vector.broadcast %273 : vector<8x1xi1> to vector<8x128xi1>
    %275 = vector.broadcast %cst_73 : f32 to vector<8x128xf32>
    %276 = arith.select %274, %272, %275 : vector<8x128xi1>, vector<8x128xf32>
    %277 = vector.shape_cast %276 : vector<8x128xf32> to vector<1x8x128xf32>
    %c0_74 = arith.constant 0 : index
    %278 = arith.index_cast %233 : i32 to index
    %c0_75 = arith.constant 0 : index
    %c0_76 = arith.constant 0 : index
    %279 = vector.load %arg7[%c0_74, %278, %c0_75, %c0_76] : memref<1x8x8x128xf32, #tpu.memory_space<vmem>>, vector<1x1x8x128xf32>
    %280 = vector.shape_cast %279 : vector<1x1x8x128xf32> to vector<1x8x128xf32>
    %281 = vector.shape_cast %277 : vector<1x8x128xf32> to vector<1x1x8x128xf32>
    tpu.vector_store %arg7[%c0_74, %278, %c0_75, %c0_76], %281 {strides = array<i32>} : memref<1x8x8x128xf32, #tpu.memory_space<vmem>>, vector<1x1x8x128xf32>,
    %c5_i32 = arith.constant 5 : i32
    %c1_i32_77 = arith.constant 1 : i32
    %282 = arith.subi %c1_i32_77, %arg0 : i32
    %283 = arith.muli %282, %c5_i32 : i32
    %c7_i32_78 = arith.constant 7 : i32
    %284 = arith.subi %c7_i32_78, %c5_i32 : i32
    %285 = arith.muli %arg0, %284 : i32
    %286 = arith.addi %283, %285 : i32
    %c8_i32_79 = arith.constant 8 : i32
    %287 = arith.muli %286, %c8_i32_79 : i32
    %288 = tpu.assume_multiple %287, 8 : i32
    %289 = arith.index_cast %288 : i32 to index
    %c0_80 = arith.constant 0 : index
    %290 = vector.load %arg9[%289, %c0_80] : memref<64x384xf32, #tpu.memory_space<vmem>>, vector<8x384xf32>
    %291 = arith.truncf %272 : vector<8x128xf32> to vector<8x128xbf16>
    %cst_81 = arith.constant dense<0.000000e+00> : vector<8x384xf32>
    %292 = tpu.matmul %291, %12, %cst_81 {dimension_numbers = #tpu.dot_dimension_numbers<[1], [0], [0], [1], [0, 0, 1, 1], [], []>} : vector<8x128xbf16>, vector<128x384xbf16>, vector<8x384xf32> -> vector<8x384xf32>
    %293 = vector.broadcast %14 : vector<1x384xf32> to vector<8x384xf32>
    %294 = arith.addf %292, %293 : vector<8x384xf32>
    %295 = vector.extract_strided_slice %290 {offsets = [0, 0], sizes = [8, 128], strides = [1, 1]} : vector<8x384xf32> to vector<8x128xf32>
    %296 = vector.extract_strided_slice %294 {offsets = [0, 0], sizes = [8, 128], strides = [1, 1]} : vector<8x384xf32> to vector<8x128xf32>
    %297 = arith.addf %295, %296 : vector<8x128xf32>
    %298 = arith.negf %297 : vector<8x128xf32>
    %299 = math.exp %298 : vector<8x128xf32>
    %cst_82 = arith.constant 1.000000e+00 : f32
    %300 = vector.broadcast %cst_82 : f32 to vector<8x128xf32>
    %301 = arith.addf %300, %299 : vector<8x128xf32>
    %302 = arith.divf %300, %301 : vector<8x128xf32>
    %303 = vector.extract_strided_slice %290 {offsets = [0, 128], sizes = [8, 128], strides = [1, 1]} : vector<8x384xf32> to vector<8x128xf32>
    %304 = vector.extract_strided_slice %294 {offsets = [0, 128], sizes = [8, 128], strides = [1, 1]} : vector<8x384xf32> to vector<8x128xf32>
    %305 = arith.addf %303, %304 : vector<8x128xf32>
    %306 = arith.negf %305 : vector<8x128xf32>
    %307 = math.exp %306 : vector<8x128xf32>
    %cst_83 = arith.constant 1.000000e+00 : f32
    %308 = vector.broadcast %cst_83 : f32 to vector<8x128xf32>
    %309 = arith.addf %308, %307 : vector<8x128xf32>
    %310 = arith.divf %308, %309 : vector<8x128xf32>
    %311 = vector.extract_strided_slice %290 {offsets = [0, 256], sizes = [8, 128], strides = [1, 1]} : vector<8x384xf32> to vector<8x128xf32>
    %312 = vector.extract_strided_slice %294 {offsets = [0, 256], sizes = [8, 128], strides = [1, 1]} : vector<8x384xf32> to vector<8x128xf32>
    %313 = arith.mulf %302, %312 : vector<8x128xf32>
    %314 = arith.addf %311, %313 : vector<8x128xf32>
    %315 = math.tanh %314 : vector<8x128xf32>
    %cst_84 = arith.constant 1.000000e+00 : f32
    %316 = vector.broadcast %cst_84 : f32 to vector<8x128xf32>
    %317 = arith.subf %316, %310 : vector<8x128xf32>
    %318 = arith.mulf %317, %315 : vector<8x128xf32>
    %319 = arith.mulf %310, %272 : vector<8x128xf32>
    %320 = arith.addf %318, %319 : vector<8x128xf32>
    %321 = vector.broadcast %286 : i32 to vector<8x1xi32>
    %322 = arith.cmpi slt, %321, %15 : vector<8x1xi32>
    %323 = vector.shape_cast %322 : vector<8x1xi1> to vector<8x1xi1>
    %324 = vector.broadcast %323 : vector<8x1xi1> to vector<8x128xi1>
    %325 = arith.select %324, %320, %272 : vector<8x128xi1>, vector<8x128xf32>
    %cst_85 = arith.constant 0.000000e+00 : f32
    %326 = vector.shape_cast %322 : vector<8x1xi1> to vector<8x1xi1>
    %327 = vector.broadcast %326 : vector<8x1xi1> to vector<8x128xi1>
    %328 = vector.broadcast %cst_85 : f32 to vector<8x128xf32>
    %329 = arith.select %327, %325, %328 : vector<8x128xi1>, vector<8x128xf32>
    %330 = vector.shape_cast %329 : vector<8x128xf32> to vector<1x8x128xf32>
    %c0_86 = arith.constant 0 : index
    %331 = arith.index_cast %286 : i32 to index
    %c0_87 = arith.constant 0 : index
    %c0_88 = arith.constant 0 : index
    %332 = vector.load %arg7[%c0_86, %331, %c0_87, %c0_88] : memref<1x8x8x128xf32, #tpu.memory_space<vmem>>, vector<1x1x8x128xf32>
    %333 = vector.shape_cast %332 : vector<1x1x8x128xf32> to vector<1x8x128xf32>
    %334 = vector.shape_cast %330 : vector<1x8x128xf32> to vector<1x1x8x128xf32>
    tpu.vector_store %arg7[%c0_86, %331, %c0_87, %c0_88], %334 {strides = array<i32>} : memref<1x8x8x128xf32, #tpu.memory_space<vmem>>, vector<1x1x8x128xf32>,
    %c6_i32 = arith.constant 6 : i32
    %c1_i32_89 = arith.constant 1 : i32
    %335 = arith.subi %c1_i32_89, %arg0 : i32
    %336 = arith.muli %335, %c6_i32 : i32
    %c7_i32_90 = arith.constant 7 : i32
    %337 = arith.subi %c7_i32_90, %c6_i32 : i32
    %338 = arith.muli %arg0, %337 : i32
    %339 = arith.addi %336, %338 : i32
    %c8_i32_91 = arith.constant 8 : i32
    %340 = arith.muli %339, %c8_i32_91 : i32
    %341 = tpu.assume_multiple %340, 8 : i32
    %342 = arith.index_cast %341 : i32 to index
    %c0_92 = arith.constant 0 : index
    %343 = vector.load %arg9[%342, %c0_92] : memref<64x384xf32, #tpu.memory_space<vmem>>, vector<8x384xf32>
    %344 = arith.truncf %325 : vector<8x128xf32> to vector<8x128xbf16>
    %cst_93 = arith.constant dense<0.000000e+00> : vector<8x384xf32>
    %345 = tpu.matmul %344, %12, %cst_93 {dimension_numbers = #tpu.dot_dimension_numbers<[1], [0], [0], [1], [0, 0, 1, 1], [], []>} : vector<8x128xbf16>, vector<128x384xbf16>, vector<8x384xf32> -> vector<8x384xf32>
    %346 = vector.broadcast %14 : vector<1x384xf32> to vector<8x384xf32>
    %347 = arith.addf %345, %346 : vector<8x384xf32>
    %348 = vector.extract_strided_slice %343 {offsets = [0, 0], sizes = [8, 128], strides = [1, 1]} : vector<8x384xf32> to vector<8x128xf32>
    %349 = vector.extract_strided_slice %347 {offsets = [0, 0], sizes = [8, 128], strides = [1, 1]} : vector<8x384xf32> to vector<8x128xf32>
    %350 = arith.addf %348, %349 : vector<8x128xf32>
    %351 = arith.negf %350 : vector<8x128xf32>
    %352 = math.exp %351 : vector<8x128xf32>
    %cst_94 = arith.constant 1.000000e+00 : f32
    %353 = vector.broadcast %cst_94 : f32 to vector<8x128xf32>
    %354 = arith.addf %353, %352 : vector<8x128xf32>
    %355 = arith.divf %353, %354 : vector<8x128xf32>
    %356 = vector.extract_strided_slice %343 {offsets = [0, 128], sizes = [8, 128], strides = [1, 1]} : vector<8x384xf32> to vector<8x128xf32>
    %357 = vector.extract_strided_slice %347 {offsets = [0, 128], sizes = [8, 128], strides = [1, 1]} : vector<8x384xf32> to vector<8x128xf32>
    %358 = arith.addf %356, %357 : vector<8x128xf32>
    %359 = arith.negf %358 : vector<8x128xf32>
    %360 = math.exp %359 : vector<8x128xf32>
    %cst_95 = arith.constant 1.000000e+00 : f32
    %361 = vector.broadcast %cst_95 : f32 to vector<8x128xf32>
    %362 = arith.addf %361, %360 : vector<8x128xf32>
    %363 = arith.divf %361, %362 : vector<8x128xf32>
    %364 = vector.extract_strided_slice %343 {offsets = [0, 256], sizes = [8, 128], strides = [1, 1]} : vector<8x384xf32> to vector<8x128xf32>
    %365 = vector.extract_strided_slice %347 {offsets = [0, 256], sizes = [8, 128], strides = [1, 1]} : vector<8x384xf32> to vector<8x128xf32>
    %366 = arith.mulf %355, %365 : vector<8x128xf32>
    %367 = arith.addf %364, %366 : vector<8x128xf32>
    %368 = math.tanh %367 : vector<8x128xf32>
    %cst_96 = arith.constant 1.000000e+00 : f32
    %369 = vector.broadcast %cst_96 : f32 to vector<8x128xf32>
    %370 = arith.subf %369, %363 : vector<8x128xf32>
    %371 = arith.mulf %370, %368 : vector<8x128xf32>
    %372 = arith.mulf %363, %325 : vector<8x128xf32>
    %373 = arith.addf %371, %372 : vector<8x128xf32>
    %374 = vector.broadcast %339 : i32 to vector<8x1xi32>
    %375 = arith.cmpi slt, %374, %15 : vector<8x1xi32>
    %376 = vector.shape_cast %375 : vector<8x1xi1> to vector<8x1xi1>
    %377 = vector.broadcast %376 : vector<8x1xi1> to vector<8x128xi1>
    %378 = arith.select %377, %373, %325 : vector<8x128xi1>, vector<8x128xf32>
    %cst_97 = arith.constant 0.000000e+00 : f32
    %379 = vector.shape_cast %375 : vector<8x1xi1> to vector<8x1xi1>
    %380 = vector.broadcast %379 : vector<8x1xi1> to vector<8x128xi1>
    %381 = vector.broadcast %cst_97 : f32 to vector<8x128xf32>
    %382 = arith.select %380, %378, %381 : vector<8x128xi1>, vector<8x128xf32>
    %383 = vector.shape_cast %382 : vector<8x128xf32> to vector<1x8x128xf32>
    %c0_98 = arith.constant 0 : index
    %384 = arith.index_cast %339 : i32 to index
    %c0_99 = arith.constant 0 : index
    %c0_100 = arith.constant 0 : index
    %385 = vector.load %arg7[%c0_98, %384, %c0_99, %c0_100] : memref<1x8x8x128xf32, #tpu.memory_space<vmem>>, vector<1x1x8x128xf32>
    %386 = vector.shape_cast %385 : vector<1x1x8x128xf32> to vector<1x8x128xf32>
    %387 = vector.shape_cast %383 : vector<1x8x128xf32> to vector<1x1x8x128xf32>
    tpu.vector_store %arg7[%c0_98, %384, %c0_99, %c0_100], %387 {strides = array<i32>} : memref<1x8x8x128xf32, #tpu.memory_space<vmem>>, vector<1x1x8x128xf32>,
    %c7_i32_101 = arith.constant 7 : i32
    %c1_i32_102 = arith.constant 1 : i32
    %388 = arith.subi %c1_i32_102, %arg0 : i32
    %389 = arith.muli %388, %c7_i32_101 : i32
    %c7_i32_103 = arith.constant 7 : i32
    %390 = arith.subi %c7_i32_103, %c7_i32_101 : i32
    %391 = arith.muli %arg0, %390 : i32
    %392 = arith.addi %389, %391 : i32
    %c8_i32_104 = arith.constant 8 : i32
    %393 = arith.muli %392, %c8_i32_104 : i32
    %394 = tpu.assume_multiple %393, 8 : i32
    %395 = arith.index_cast %394 : i32 to index
    %c0_105 = arith.constant 0 : index
    %396 = vector.load %arg9[%395, %c0_105] : memref<64x384xf32, #tpu.memory_space<vmem>>, vector<8x384xf32>
    %397 = arith.truncf %378 : vector<8x128xf32> to vector<8x128xbf16>
    %cst_106 = arith.constant dense<0.000000e+00> : vector<8x384xf32>
    %398 = tpu.matmul %397, %12, %cst_106 {dimension_numbers = #tpu.dot_dimension_numbers<[1], [0], [0], [1], [0, 0, 1, 1], [], []>} : vector<8x128xbf16>, vector<128x384xbf16>, vector<8x384xf32> -> vector<8x384xf32>
    %399 = vector.broadcast %14 : vector<1x384xf32> to vector<8x384xf32>
    %400 = arith.addf %398, %399 : vector<8x384xf32>
    %401 = vector.extract_strided_slice %396 {offsets = [0, 0], sizes = [8, 128], strides = [1, 1]} : vector<8x384xf32> to vector<8x128xf32>
    %402 = vector.extract_strided_slice %400 {offsets = [0, 0], sizes = [8, 128], strides = [1, 1]} : vector<8x384xf32> to vector<8x128xf32>
    %403 = arith.addf %401, %402 : vector<8x128xf32>
    %404 = arith.negf %403 : vector<8x128xf32>
    %405 = math.exp %404 : vector<8x128xf32>
    %cst_107 = arith.constant 1.000000e+00 : f32
    %406 = vector.broadcast %cst_107 : f32 to vector<8x128xf32>
    %407 = arith.addf %406, %405 : vector<8x128xf32>
    %408 = arith.divf %406, %407 : vector<8x128xf32>
    %409 = vector.extract_strided_slice %396 {offsets = [0, 128], sizes = [8, 128], strides = [1, 1]} : vector<8x384xf32> to vector<8x128xf32>
    %410 = vector.extract_strided_slice %400 {offsets = [0, 128], sizes = [8, 128], strides = [1, 1]} : vector<8x384xf32> to vector<8x128xf32>
    %411 = arith.addf %409, %410 : vector<8x128xf32>
    %412 = arith.negf %411 : vector<8x128xf32>
    %413 = math.exp %412 : vector<8x128xf32>
    %cst_108 = arith.constant 1.000000e+00 : f32
    %414 = vector.broadcast %cst_108 : f32 to vector<8x128xf32>
    %415 = arith.addf %414, %413 : vector<8x128xf32>
    %416 = arith.divf %414, %415 : vector<8x128xf32>
    %417 = vector.extract_strided_slice %396 {offsets = [0, 256], sizes = [8, 128], strides = [1, 1]} : vector<8x384xf32> to vector<8x128xf32>
    %418 = vector.extract_strided_slice %400 {offsets = [0, 256], sizes = [8, 128], strides = [1, 1]} : vector<8x384xf32> to vector<8x128xf32>
    %419 = arith.mulf %408, %418 : vector<8x128xf32>
    %420 = arith.addf %417, %419 : vector<8x128xf32>
    %421 = math.tanh %420 : vector<8x128xf32>
    %cst_109 = arith.constant 1.000000e+00 : f32
    %422 = vector.broadcast %cst_109 : f32 to vector<8x128xf32>
    %423 = arith.subf %422, %416 : vector<8x128xf32>
    %424 = arith.mulf %423, %421 : vector<8x128xf32>
    %425 = arith.mulf %416, %378 : vector<8x128xf32>
    %426 = arith.addf %424, %425 : vector<8x128xf32>
    %427 = vector.broadcast %392 : i32 to vector<8x1xi32>
    %428 = arith.cmpi slt, %427, %15 : vector<8x1xi32>
    %429 = vector.shape_cast %428 : vector<8x1xi1> to vector<8x1xi1>
    %430 = vector.broadcast %429 : vector<8x1xi1> to vector<8x128xi1>
    %431 = arith.select %430, %426, %378 : vector<8x128xi1>, vector<8x128xf32>
    %cst_110 = arith.constant 0.000000e+00 : f32
    %432 = vector.shape_cast %428 : vector<8x1xi1> to vector<8x1xi1>
    %433 = vector.broadcast %432 : vector<8x1xi1> to vector<8x128xi1>
    %434 = vector.broadcast %cst_110 : f32 to vector<8x128xf32>
    %435 = arith.select %433, %431, %434 : vector<8x128xi1>, vector<8x128xf32>
    %436 = vector.shape_cast %435 : vector<8x128xf32> to vector<1x8x128xf32>
    %c0_111 = arith.constant 0 : index
    %437 = arith.index_cast %392 : i32 to index
    %c0_112 = arith.constant 0 : index
    %c0_113 = arith.constant 0 : index
    %438 = vector.load %arg7[%c0_111, %437, %c0_112, %c0_113] : memref<1x8x8x128xf32, #tpu.memory_space<vmem>>, vector<1x1x8x128xf32>
    %439 = vector.shape_cast %438 : vector<1x1x8x128xf32> to vector<1x8x128xf32>
    %440 = vector.shape_cast %436 : vector<1x8x128xf32> to vector<1x1x8x128xf32>
    tpu.vector_store %arg7[%c0_111, %437, %c0_112, %c0_113], %440 {strides = array<i32>} : memref<1x8x8x128xf32, #tpu.memory_space<vmem>>, vector<1x1x8x128xf32>,
    %c8_i32_114 = arith.constant 8 : i32
    %c0_115 = arith.constant 0 : index
    %c0_116 = arith.constant 0 : index
    %c0_117 = arith.constant 0 : index
    %441 = vector.load %arg8[%c0_115, %c0_116, %c0_117] : memref<1x8x128xf32, #tpu.memory_space<vmem>>, vector<1x8x128xf32>
    %442 = vector.shape_cast %441 : vector<1x8x128xf32> to vector<8x128xf32>
    %443 = vector.shape_cast %431 : vector<8x128xf32> to vector<1x8x128xf32>
    tpu.vector_store %arg8[%c0_115, %c0_116, %c0_117], %443 {strides = array<i32>} : memref<1x8x128xf32, #tpu.memory_space<vmem>>, vector<1x8x128xf32>,
    return
  }
  func.func @transform_0(%arg0: i32) -> (i32, i32) {
    %c0_i32 = arith.constant 0 : i32
    %c0_i32_0 = arith.constant 0 : i32
    %c0_i32_1 = arith.constant 0 : i32
    return %c0_i32, %c0_i32_0 : i32, i32
  }
  func.func @transform_1(%arg0: i32) -> (i32, i32, i32) {
    %c0_i32 = arith.constant 0 : i32
    %c0_i32_0 = arith.constant 0 : i32
    %c0_i32_1 = arith.constant 0 : i32
    %c0_i32_2 = arith.constant 0 : i32
    return %c0_i32, %c0_i32_0, %c0_i32_1 : i32, i32, i32
  }
  func.func @transform_2(%arg0: i32) -> (i32, i32, i32) {
    %c0_i32 = arith.constant 0 : i32
    %c0_i32_0 = arith.constant 0 : i32
    %c0_i32_1 = arith.constant 0 : i32
    return %arg0, %c0_i32, %c0_i32_0 : i32, i32, i32
  }
  func.func @transform_3(%arg0: i32) -> (i32, i32, i32) {
    %c0_i32 = arith.constant 0 : i32
    %c0_i32_0 = arith.constant 0 : i32
    %c0_i32_1 = arith.constant 0 : i32
    return %arg0, %c0_i32, %c0_i32_0 : i32, i32, i32
  }
  func.func @transform_4(%arg0: i32) -> (i32, i32, i32) {
    %c0_i32 = arith.constant 0 : i32
    %c0_i32_0 = arith.constant 0 : i32
    %c0_i32_1 = arith.constant 0 : i32
    return %arg0, %c0_i32, %c0_i32_0 : i32, i32, i32
  }
  func.func @transform_5(%arg0: i32) -> (i32, i32, i32) {
    %c0_i32 = arith.constant 0 : i32
    %c0_i32_0 = arith.constant 0 : i32
    %c0_i32_1 = arith.constant 0 : i32
    return %arg0, %c0_i32, %c0_i32_0 : i32, i32, i32
  }
  func.func @transform_6(%arg0: i32) -> (i32, i32, i32, i32) {
    %c0_i32 = arith.constant 0 : i32
    %c0_i32_0 = arith.constant 0 : i32
    %c0_i32_1 = arith.constant 0 : i32
    %c0_i32_2 = arith.constant 0 : i32
    return %arg0, %c0_i32, %c0_i32_0, %c0_i32_1 : i32, i32, i32, i32
  }
  func.func @transform_7(%arg0: i32) -> (i32, i32, i32) {
    %c0_i32 = arith.constant 0 : i32
    %c0_i32_0 = arith.constant 0 : i32
    %c0_i32_1 = arith.constant 0 : i32
    return %arg0, %c0_i32, %c0_i32_0 : i32, i32, i32
  }
}

</mosaic_0001>

<llo_original>
// kernel: tpu_custom_call.1
$region0: #{tpu_custom_call.1}
  #allocation0 [shape = 'u32[]', space=smem, size = 0x4, offset = 0x4, fixed_abs, tag = 'smem constant byte address 0x4 - core index']
  #allocation1 [shape = 'u32[144,128]{1,0:T(1,128)}', space=vmem, size = 0x12000, scoped, tag = 'internal scratch']
  #allocation2 [shape = 'f32[64,384]{1,0:T(8,128)}', space=vmem, size = 0x18000, scoped, tag = 'scratch operand']
  %s0 = inlined_call_operand.vmem [shape: s32[8,1], index: 0, kind: input, shape index: {}]
  %s1 = inlined_call_operand.hbm [shape: f32[8,8,128], index: 1, kind: input, shape index: {}]
  %s2 = inlined_call_operand.hbm [shape: bf16[2,128,384], index: 2, kind: input, shape index: {}]
  %s3 = inlined_call_operand.hbm [shape: bf16[2,128,384], index: 3, kind: input, shape index: {}]
  %s4 = inlined_call_operand.vmem [shape: f32[2,1,384], index: 4, kind: input, shape index: {}]
  %s5 = inlined_call_operand.vmem [shape: f32[2,1,384], index: 5, kind: input, shape index: {}]
  %s6 = inlined_call_operand.hbm [shape: f32[2,8,8,128], index: 6, kind: output, shape index: {0}]
  %s7 = inlined_call_operand.hbm [shape: f32[2,8,128], index: 7, kind: output, shape index: {1}]
  %8 = xla_tuple %s6, %s7
  %s9 = sld [smem:[#allocation0]]
  $region77: #{tpu_custom_call.1} parent=0
    _
  %s11 = ssub.s32 1, %s9
  %s12 = scalar_select 0, %s11, %s9
  $region1: #{tpu_custom_call.1} parent=0
    #allocation3 [shape = 'u8[32768]{0}', space=vmem, size = 0x8000, scoped, tag = 'input window, operand 1, single buffered']
    #allocation4 [shape = 's32[2]{0}', space=sflag, size = 0x8, scoped, tag = 'scoped memory for tpu_custom_call.1']
    #allocation5 [shape = 's32[2]{0}', space=sflag, size = 0x8, scoped, tag = 'scoped memory for tpu_custom_call.1']
    #allocation6 [shape = 'u8[196608]{0}', space=vmem, size = 0x30000, scoped, tag = 'input window, operand 2']
    #allocation7 [shape = 's32[2]{0}', space=sflag, size = 0x8, scoped, tag = 'scoped memory for tpu_custom_call.1']
    #allocation8 [shape = 'u8[196608]{0}', space=vmem, size = 0x30000, scoped, tag = 'input window, operand 3']
    #allocation9 [shape = 'u8[65536]{0}', space=vmem, size = 0x10000, scoped, tag = 'output window, operand 0']
    #allocation10 [shape = 'u8[8192]{0}', space=vmem, size = 0x2000, scoped, tag = 'output window, operand 1']
    #allocation11 [shape = 's32[2]{0}', space=sflag, size = 0x8, scoped, tag = 'scoped memory for tpu_custom_call.1']
    %13 = vsyncpa [#allocation4], 0
    %14 = vsyncpa [#allocation7], 0
    %s15 = scalar_lea.sflag [#allocation7], 1
    %16 = vsyncpa %s15, 0
    %17 = vsyncpa [#allocation5], 0
    %s18 = scalar_lea.sflag [#allocation5], 1
    %19 = vsyncpa %s18, 0
    %20 = vsyncpa [#allocation11], 0
    %s21 = scalar_lea.sflag [#allocation11], 1
    %22 = vsyncpa %s21, 0
    loop: start=0, step=1, limit=4
    $region2: #{tpu_custom_call.1} parent=1 // loop_pre_header
      _
    $region3: #{tpu_custom_call.1} parent=1 // loop_header
      %s24 = sphi 0, %s28
      %p25 = scmp.ge.s32.totalorder %s24, 4
      %s32 = sphi 0, %s32
      %s34 = sphi 0, %s32
      %s35 = sphi 0, %s34
      %s49 = sphi 0, %s35
      %s53 = sphi 0, %s53
      %s55 = sphi 0, %s53
      %s56 = sphi 0, %s55
      %s70 = sphi 0, %s56
      %s76 = sphi 0, %s78
      %s79 = sphi 0, %s76
      %s80 = sphi 0, %s79
      %s96 = sphi 0, %s80
      %s102 = sphi 0, %s104
      %s105 = sphi 0, %s102
      %s106 = sphi 0, %s105
      %s122 = sphi 0, %s106
      %s128 = sphi 0, %s130
      %s131 = sphi 0, %s128
      %s132 = sphi 0, %s131
      %s148 = sphi 0, %s132
      %s154 = sphi 0, %s156
      %s157 = sphi 0, %s154
      %s158 = sphi 0, %s157
      %s174 = sphi 0, %s158
      %s180 = sphi 0, %s182
      %s183 = sphi 0, %s180
      %s184 = sphi 0, %s183
      %s200 = sphi 0, %s184
      %s206 = sphi 0, %s208
      %s209 = sphi 0, %s206
      %s210 = sphi 0, %s209
      %s226 = sphi 0, %s210
    $region4: #{tpu_custom_call.1} parent=1 // loop_header_branch
      %27 = sbr.rel (%p25) target = $region8
    $region5: #{tpu_custom_call.1} parent=1 // loop_body
      %s29 = ssub.s32 %s24, 1
      %s30 = ssub.s32 %s24, 2
      %s31 = sadd.s32 %s24, 1
      %s33 = sadd.s32 %s32, 1
      %p36 = scmp.eq.s32.totalorder %s24, 1
      %p37 = scmp.ne.s32.totalorder %s32, %s34
      %p38 = scmp.eq.s32.totalorder %s24, 0
      %p39 = por %p37, %p38
      %p40 = scmp.ne.s32.totalorder %s32, %s34
      %p41 = scmp.eq.s32.totalorder %s29, 1
      %p42 = por %p40, %p41
      %p43 = scmp.ne.s32.totalorder %s34, %s35
      %p44 = scmp.eq.s32.totalorder %s29, 0
      %p45 = por %p43, %p44
      %p46 = scmp.ne.s32.totalorder %s34, %s35
      %p47 = scmp.eq.s32.totalorder %s30, 1
      %p48 = por %p46, %p47
      %p50 = scmp.ne.s32.totalorder %s35, %s49
      %p51 = scmp.eq.s32.totalorder %s30, 0
      %p52 = por %p50, %p51
      %s54 = sadd.s32 %s53, 1
      %p57 = scmp.eq.s32.totalorder %s24, 1
      %p58 = scmp.ne.s32.totalorder %s53, %s55
      %p59 = scmp.eq.s32.totalorder %s24, 0
      %p60 = por %p58, %p59
      %p61 = scmp.ne.s32.totalorder %s53, %s55
      %p62 = scmp.eq.s32.totalorder %s29, 1
      %p63 = por %p61, %p62
      %p64 = scmp.ne.s32.totalorder %s55, %s56
      %p65 = scmp.eq.s32.totalorder %s29, 0
      %p66 = por %p64, %p65
      %p67 = scmp.ne.s32.totalorder %s55, %s56
      %p68 = scmp.eq.s32.totalorder %s30, 1
      %p69 = por %p67, %p68
      %p71 = scmp.ne.s32.totalorder %s56, %s70
      %p72 = scmp.eq.s32.totalorder %s30, 0
      %p73 = por %p71, %p72
      %s74 = ssub.s32 %s24, %s31
      %p75 = scmp.eq.s32.totalorder %s74, 0
      %s77 = sadd.s32 %s76, 1
      %s78 = scalar_select %p75, %s76, %s77
      %p81 = pneg %p75
      %p82 = scmp.eq.s32.totalorder %s24, 1
      %p83 = por %p81, %p82
      %p84 = scmp.ne.s32.totalorder %s76, %s79
      %p85 = scmp.eq.s32.totalorder %s24, 0
      %p86 = por %p84, %p85
      %p87 = scmp.ne.s32.totalorder %s76, %s79
      %p88 = scmp.eq.s32.totalorder %s29, 1
      %p89 = por %p87, %p88
      %p90 = scmp.ne.s32.totalorder %s79, %s80
      %p91 = scmp.eq.s32.totalorder %s29, 0
      %p92 = por %p90, %p91
      %p93 = scmp.ne.s32.totalorder %s79, %s80
      %p94 = scmp.eq.s32.totalorder %s30, 1
      %p95 = por %p93, %p94
      %p97 = scmp.ne.s32.totalorder %s80, %s96
      %p98 = scmp.eq.s32.totalorder %s30, 0
      %p99 = por %p97, %p98
      %s100 = ssub.s32 %s24, %s31
      %p101 = scmp.eq.s32.totalorder %s100, 0
      %s103 = sadd.s32 %s102, 1
      %s104 = scalar_select %p101, %s102, %s103
      %p107 = pneg %p101
      %p108 = scmp.eq.s32.totalorder %s24, 1
      %p109 = por %p107, %p108
      %p110 = scmp.ne.s32.totalorder %s102, %s105
      %p111 = scmp.eq.s32.totalorder %s24, 0
      %p112 = por %p110, %p111
      %p113 = scmp.ne.s32.totalorder %s102, %s105
      %p114 = scmp.eq.s32.totalorder %s29, 1
      %p115 = por %p113, %p114
      %p116 = scmp.ne.s32.totalorder %s105, %s106
      %p117 = scmp.eq.s32.totalorder %s29, 0
      %p118 = por %p116, %p117
      %p119 = scmp.ne.s32.totalorder %s105, %s106
      %p120 = scmp.eq.s32.totalorder %s30, 1
      %p121 = por %p119, %p120
      %p123 = scmp.ne.s32.totalorder %s106, %s122
      %p124 = scmp.eq.s32.totalorder %s30, 0
      %p125 = por %p123, %p124
      %s126 = ssub.s32 %s24, %s31
      %p127 = scmp.eq.s32.totalorder %s126, 0
      %s129 = sadd.s32 %s128, 1
      %s130 = scalar_select %p127, %s128, %s129
      %p133 = pneg %p127
      %p134 = scmp.eq.s32.totalorder %s24, 1
      %p135 = por %p133, %p134
      %p136 = scmp.ne.s32.totalorder %s128, %s131
      %p137 = scmp.eq.s32.totalorder %s24, 0
      %p138 = por %p136, %p137
      %p139 = scmp.ne.s32.totalorder %s128, %s131
      %p140 = scmp.eq.s32.totalorder %s29, 1
      %p141 = por %p139, %p140
      %p142 = scmp.ne.s32.totalorder %s131, %s132
      %p143 = scmp.eq.s32.totalorder %s29, 0
      %p144 = por %p142, %p143
      %p145 = scmp.ne.s32.totalorder %s131, %s132
      %p146 = scmp.eq.s32.totalorder %s30, 1
      %p147 = por %p145, %p146
      %p149 = scmp.ne.s32.totalorder %s132, %s148
      %p150 = scmp.eq.s32.totalorder %s30, 0
      %p151 = por %p149, %p150
      %s152 = ssub.s32 %s24, %s31
      %p153 = scmp.eq.s32.totalorder %s152, 0
      %s155 = sadd.s32 %s154, 1
      %s156 = scalar_select %p153, %s154, %s155
      %p159 = pneg %p153
      %p160 = scmp.eq.s32.totalorder %s24, 1
      %p161 = por %p159, %p160
      %p162 = scmp.ne.s32.totalorder %s154, %s157
      %p163 = scmp.eq.s32.totalorder %s24, 0
      %p164 = por %p162, %p163
      %p165 = scmp.ne.s32.totalorder %s154, %s157
      %p166 = scmp.eq.s32.totalorder %s29, 1
      %p167 = por %p165, %p166
      %p168 = scmp.ne.s32.totalorder %s157, %s158
      %p169 = scmp.eq.s32.totalorder %s29, 0
      %p170 = por %p168, %p169
      %p171 = scmp.ne.s32.totalorder %s157, %s158
      %p172 = scmp.eq.s32.totalorder %s30, 1
      %p173 = por %p171, %p172
      %p175 = scmp.ne.s32.totalorder %s158, %s174
      %p176 = scmp.eq.s32.totalorder %s30, 0
      %p177 = por %p175, %p176
      %s178 = ssub.s32 %s24, %s31
      %p179 = scmp.eq.s32.totalorder %s178, 0
      %s181 = sadd.s32 %s180, 1
      %s182 = scalar_select %p179, %s180, %s181
      %p185 = pneg %p179
      %p186 = scmp.eq.s32.totalorder %s24, 1
      %p187 = por %p185, %p186
      %p188 = scmp.ne.s32.totalorder %s180, %s183
      %p189 = scmp.eq.s32.totalorder %s24, 0
      %p190 = por %p188, %p189
      %p191 = scmp.ne.s32.totalorder %s180, %s183
      %p192 = scmp.eq.s32.totalorder %s29, 1
      %p193 = por %p191, %p192
      %p194 = scmp.ne.s32.totalorder %s183, %s184
      %p195 = scmp.eq.s32.totalorder %s29, 0
      %p196 = por %p194, %p195
      %p197 = scmp.ne.s32.totalorder %s183, %s184
      %p198 = scmp.eq.s32.totalorder %s30, 1
      %p199 = por %p197, %p198
      %p201 = scmp.ne.s32.totalorder %s184, %s200
      %p202 = scmp.eq.s32.totalorder %s30, 0
      %p203 = por %p201, %p202
      %s204 = ssub.s32 %s24, %s31
      %p205 = scmp.eq.s32.totalorder %s204, 0
      %s207 = sadd.s32 %s206, 1
      %s208 = scalar_select %p205, %s206, %s207
      %p211 = pneg %p205
      %p212 = scmp.eq.s32.totalorder %s24, 1
      %p213 = por %p211, %p212
      %p214 = scmp.ne.s32.totalorder %s206, %s209
      %p215 = scmp.eq.s32.totalorder %s24, 0
      %p216 = por %p214, %p215
      %p217 = scmp.ne.s32.totalorder %s206, %s209
      %p218 = scmp.eq.s32.totalorder %s29, 1
      %p219 = por %p217, %p218
      %p220 = scmp.ne.s32.totalorder %s209, %s210
      %p221 = scmp.eq.s32.totalorder %s29, 0
      %p222 = por %p220, %p221
      %p223 = scmp.ne.s32.totalorder %s209, %s210
      %p224 = scmp.eq.s32.totalorder %s30, 1
      %p225 = por %p223, %p224
      %p227 = scmp.ne.s32.totalorder %s210, %s226
      %p228 = scmp.eq.s32.totalorder %s30, 0
      %p229 = por %p227, %p228
      %p230 = scmp.le.s32.totalorder 1, %s24
      %p231 = scmp.lt.s32.totalorder %s24, 3
      %p232 = pnand %p230, %p231
      %p233 = pneg %p232
      // Predicated region
      $region9: #{tpu_custom_call.1} parent=5 // pred_check
        _
      $region10: #{tpu_custom_call.1} parent=5 // pred_check_branch
        %235 = sbr.rel (%p232) target = $region12
      $region11: #{tpu_custom_call.1} parent=5 // pred_region
        %s236 = ssub.s32 %s24, 1
        // Predicated region
        $region13: #{tpu_custom_call.1} parent=11 // pred_check
          %p237 = pneg %p45
        $region14: #{tpu_custom_call.1} parent=11 // pred_check_branch
          %239 = sbr.rel (%p237) target = $region16
        $region15: #{tpu_custom_call.1} parent=11 // pred_region
          _
        $region16: #{tpu_custom_call.1} parent=11 // pred_fallthru
          _
        // Predicated region
        $region17: #{tpu_custom_call.1} parent=11 // pred_check
          %p240 = pneg %p66
        $region18: #{tpu_custom_call.1} parent=11 // pred_check_branch
          %242 = sbr.rel (%p240) target = $region20
        $region19: #{tpu_custom_call.1} parent=11 // pred_region
          %s244 = ssub.s32 1024, 1024
          %245 = vsyncadd [#allocation4], %s244
          %s246 = sshll.u32 [#allocation3], 4
          %s247 = int_to_ptr.vmem [resolvable:$true] %s246
          %252 = dma.hbm_to_vmem [thread:$0]  %s1, 1024, %s247, [#allocation4], 128, 128, 8
        $region20: #{tpu_custom_call.1} parent=11 // pred_fallthru
          _
      $region12: #{tpu_custom_call.1} parent=5 // pred_fallthru
        _
      %p253 = scmp.lt.s32.totalorder %s24, 2
      // Predicated region
      $region21: #{tpu_custom_call.1} parent=5 // pred_check
        %p254 = pneg %p253
      $region22: #{tpu_custom_call.1} parent=5 // pred_check_branch
        %256 = sbr.rel (%p254) target = $region24
      $region23: #{tpu_custom_call.1} parent=5 // pred_region
        // Predicated region
        $region25: #{tpu_custom_call.1} parent=23 // pred_check
          %p257 = pneg %p86
        $region26: #{tpu_custom_call.1} parent=23 // pred_check_branch
          %259 = sbr.rel (%p257) target = $region28
        $region27: #{tpu_custom_call.1} parent=23 // pred_region
          %s260 = sand.u32 %s24, 1
          %s261 = scalar_lea.sflag [#allocation7], %s260
          %s262 = sand.u32 %s76, 1
          %s263 = smul.addr %s262, 192
          %s264 = scalar_lea.vmem [#allocation6], %s263
          %s266 = ssub.s32 3072, 3072
          %267 = vsyncadd %s261, %s266
          %s268 = smul.addr %s24, 48
          %s269 = smul.addr %s268, 64
          %s270 = scalar_lea.hbm %s2, %s269
          %s271 = sshll.u32 %s264, 4
          %s272 = int_to_ptr.vmem [resolvable:$true] %s271
          %277 = dma.hbm_to_vmem [thread:$0]  %s270, 3072, %s272, %s261, 192, 192, 12
        $region28: #{tpu_custom_call.1} parent=23 // pred_fallthru
          _
        // Predicated region
        $region29: #{tpu_custom_call.1} parent=23 // pred_check
          %p278 = pneg %p112
        $region30: #{tpu_custom_call.1} parent=23 // pred_check_branch
          %280 = sbr.rel (%p278) target = $region32
        $region31: #{tpu_custom_call.1} parent=23 // pred_region
          %s281 = sand.u32 %s24, 1
          %s282 = scalar_lea.sflag [#allocation7], %s281
          %s283 = sand.u32 %s102, 1
          %s284 = smul.addr %s283, 192
          %s285 = scalar_lea.vmem [#allocation8], %s284
          %s287 = ssub.s32 3072, 3072
          %288 = vsyncadd %s282, %s287
          %s289 = smul.addr %s24, 48
          %s290 = smul.addr %s289, 64
          %s291 = scalar_lea.hbm %s3, %s290
          %s292 = sshll.u32 %s285, 4
          %s293 = int_to_ptr.vmem [resolvable:$true] %s292
          %298 = dma.hbm_to_vmem [thread:$0]  %s291, 3072, %s293, %s282, 192, 192, 12
        $region32: #{tpu_custom_call.1} parent=23 // pred_fallthru
          _
        // Predicated region
        $region33: #{tpu_custom_call.1} parent=23 // pred_check
          %p299 = pneg %p138
        $region34: #{tpu_custom_call.1} parent=23 // pred_check_branch
          %301 = sbr.rel (%p299) target = $region36
        $region35: #{tpu_custom_call.1} parent=23 // pred_region
          %p302 = scmp.lt.s32.totalorder %s24, 1
          %s303 = scalar_select %p302, %s24, 1
          %s304 = smul.addr %s303, 3
          %s305 = scalar_lea.vmem %s4, %s304
        $region36: #{tpu_custom_call.1} parent=23 // pred_fallthru
          _
        // Predicated region
        $region37: #{tpu_custom_call.1} parent=23 // pred_check
          %p306 = pneg %p164
        $region38: #{tpu_custom_call.1} parent=23 // pred_check_branch
          %308 = sbr.rel (%p306) target = $region40
        $region39: #{tpu_custom_call.1} parent=23 // pred_region
          %p309 = scmp.lt.s32.totalorder %s24, 1
          %s310 = scalar_select %p309, %s24, 1
          %s311 = smul.addr %s310, 3
          %s312 = scalar_lea.vmem %s5, %s311
        $region40: #{tpu_custom_call.1} parent=23 // pred_fallthru
          _
      $region24: #{tpu_custom_call.1} parent=5 // pred_fallthru
        _
      %p313 = scmp.le.s32.totalorder 1, %s24
      %p314 = scmp.lt.s32.totalorder %s24, 3
      %p315 = pnand %p313, %p314
      %p316 = pneg %p315
      // Predicated region
      $region41: #{tpu_custom_call.1} parent=5 // pred_check
        _
      $region42: #{tpu_custom_call.1} parent=5 // pred_check_branch
        %318 = sbr.rel (%p315) target = $region44
      $region43: #{tpu_custom_call.1} parent=5 // pred_region
        %s319 = ssub.s32 %s24, 1
        // Predicated region
        $region45: #{tpu_custom_call.1} parent=43 // pred_check
          %p320 = pneg %p66
        $region46: #{tpu_custom_call.1} parent=43 // pred_check_branch
          %322 = sbr.rel (%p320) target = $region48
        $region47: #{tpu_custom_call.1} parent=43 // pred_region
          %323 = dma.done [#allocation4], 1024
        $region48: #{tpu_custom_call.1} parent=43 // pred_fallthru
          _
        %s324 = sand.u32 %s29, 1
        %s325 = scalar_lea.sflag [#allocation7], %s324
        %s326 = sand.u32 %s79, 1
        %s327 = smul.addr %s326, 192
        %s328 = scalar_lea.vmem [#allocation6], %s327
        // Predicated region
        $region49: #{tpu_custom_call.1} parent=43 // pred_check
          %p329 = pneg %p92
        $region50: #{tpu_custom_call.1} parent=43 // pred_check_branch
          %331 = sbr.rel (%p329) target = $region52
        $region51: #{tpu_custom_call.1} parent=43 // pred_region
          %332 = dma.done %s325, 3072
        $region52: #{tpu_custom_call.1} parent=43 // pred_fallthru
          _
        %s333 = sand.u32 %s29, 1
        %s334 = scalar_lea.sflag [#allocation7], %s333
        %s335 = sand.u32 %s105, 1
        %s336 = smul.addr %s335, 192
        %s337 = scalar_lea.vmem [#allocation8], %s336
        // Predicated region
        $region53: #{tpu_custom_call.1} parent=43 // pred_check
          %p338 = pneg %p118
        $region54: #{tpu_custom_call.1} parent=43 // pred_check_branch
          %340 = sbr.rel (%p338) target = $region56
        $region55: #{tpu_custom_call.1} parent=43 // pred_region
          %341 = dma.done %s334, 3072
        $region56: #{tpu_custom_call.1} parent=43 // pred_fallthru
          _
        %p342 = pneg %p45
        %p343 = pneg %p42
        %p344 = pneg %p66
        %p345 = pneg %p63
        %s346 = sand.u32 %s29, 1
        %s347 = scalar_lea.sflag [#allocation7], %s346
        %s348 = sand.u32 %s79, 1
        %s349 = smul.addr %s348, 192
        %s350 = scalar_lea.vmem [#allocation6], %s349
        %p351 = pneg %p92
        %p352 = pneg %p89
        %s353 = sand.u32 %s29, 1
        %s354 = scalar_lea.sflag [#allocation7], %s353
        %s355 = sand.u32 %s105, 1
        %s356 = smul.addr %s355, 192
        %s357 = scalar_lea.vmem [#allocation8], %s356
        %p358 = pneg %p118
        %p359 = pneg %p115
        %p360 = scmp.lt.s32.totalorder %s29, 1
        %s361 = scalar_select %p360, %s29, 1
        %s362 = smul.addr %s361, 3
        %s363 = scalar_lea.vmem %s4, %s362
        %p364 = pneg %p144
        %p365 = pneg %p141
        %p366 = scmp.lt.s32.totalorder %s29, 1
        %s367 = scalar_select %p366, %s29, 1
        %s368 = smul.addr %s367, 3
        %s369 = scalar_lea.vmem %s5, %s368
        %p370 = pneg %p170
        %p371 = pneg %p167
        %p372 = pneg %p196
        %p373 = pneg %p193
        %s374 = sand.u32 %s183, 1
        %s375 = scalar_lea.sflag [#allocation5], %s374
        %s376 = sand.u32 %s183, 1
        %s377 = smul.addr %s376, 64
        %s378 = scalar_lea.vmem [#allocation9], %s377
        %p379 = pneg %p222
        %p380 = pneg %p219
        %s381 = sand.u32 %s209, 1
        %s382 = scalar_lea.sflag [#allocation11], %s381
        %s383 = sand.u32 %s209, 1
        %s384 = smul.addr %s383, 8
        %s385 = scalar_lea.vmem [#allocation10], %s384
        %p386 = scmp.lt.s32.totalorder %s29, 1
        %s387 = scalar_select %p386, %s29, 1
        %s388 = smul.addr %s387, 3
        %s389 = scalar_lea.vmem %s4, %s388
        %p390 = scmp.lt.s32.totalorder %s29, 1
        %s391 = scalar_select %p390, %s29, 1
        %s392 = smul.addr %s391, 3
        %s393 = scalar_lea.vmem %s5, %s392
        %v395 = vld [vmem:[#allocation3] sm:$0xff]
        %v396 = vld [vmem:[#allocation3 + $0x8] sm:$0xff]
        %v397 = vld [vmem:[#allocation3 + $0x10] sm:$0xff]
        %v398 = vld [vmem:[#allocation3 + $0x18] sm:$0xff]
        %v399 = vld [vmem:[#allocation3 + $0x20] sm:$0xff]
        %v400 = vld [vmem:[#allocation3 + $0x28] sm:$0xff]
        %v401 = vld [vmem:[#allocation3 + $0x30] sm:$0xff]
        %v402 = vld [vmem:[#allocation3 + $0x38] sm:$0xff]
        %v403 = vpack.c.bf16 %v396, %v395
        %v404 = vpack.c.bf16 %v398, %v397
        %v405 = vpack.c.bf16 %v400, %v399
        %v406 = vpack.c.bf16 %v402, %v401
        %v407 = vld [vmem:[%s328] sm:$0xff]
        %v408 = vld [vmem:[%s328 + $0x8] sm:$0xf]
        %v409 = vld [vmem:[%s328 + $0xc] sm:$0xff]
        %v410 = vld [vmem:[%s328 + $0x14] sm:$0xf]
        %v411 = vld [vmem:[%s328 + $0x18] sm:$0xff]
        %v412 = vld [vmem:[%s328 + $0x20] sm:$0xf]
        %v413 = vld [vmem:[%s328 + $0x24] sm:$0xff]
        %v414 = vld [vmem:[%s328 + $0x2c] sm:$0xf]
        %v415 = vld [vmem:[%s328 + $0x30] sm:$0xff]
        %v416 = vld [vmem:[%s328 + $0x38] sm:$0xf]
        %v417 = vld [vmem:[%s328 + $0x3c] sm:$0xff]
        %v418 = vld [vmem:[%s328 + $0x44] sm:$0xf]
        %v419 = vld [vmem:[%s328 + $0x48] sm:$0xff]
        %v420 = vld [vmem:[%s328 + $0x50] sm:$0xf]
        %v421 = vld [vmem:[%s328 + $0x54] sm:$0xff]
        %v422 = vld [vmem:[%s328 + $0x5c] sm:$0xf]
        %v423 = vld [vmem:[%s328 + $0x60] sm:$0xff]
        %v424 = vld [vmem:[%s328 + $0x68] sm:$0xf]
        %v425 = vld [vmem:[%s328 + $0x6c] sm:$0xff]
        %v426 = vld [vmem:[%s328 + $0x74] sm:$0xf]
        %v427 = vld [vmem:[%s328 + $0x78] sm:$0xff]
        %v428 = vld [vmem:[%s328 + $0x80] sm:$0xf]
        %v429 = vld [vmem:[%s328 + $0x84] sm:$0xff]
        %v430 = vld [vmem:[%s328 + $0x8c] sm:$0xf]
        %v431 = vld [vmem:[%s328 + $0x90] sm:$0xff]
        %v432 = vld [vmem:[%s328 + $0x98] sm:$0xf]
        %v433 = vld [vmem:[%s328 + $0x9c] sm:$0xff]
        %v434 = vld [vmem:[%s328 + $0xa4] sm:$0xf]
        %v435 = vld [vmem:[%s328 + $0xa8] sm:$0xff]
        %v436 = vld [vmem:[%s328 + $0xb0] sm:$0xf]
        %v437 = vld [vmem:[%s328 + $0xb4] sm:$0xff]
        %v438 = vld [vmem:[%s328 + $0xbc] sm:$0xf]
        %v439 = vld [vmem:[%s389] sm:$0x7]
        %v441 = vlaneseq
        %v442 = vshrl.u32 %v441, 7
        %v443 = vsub.s32 0, %v442
        %v444 = vrot.slane %v439, %v443
        %v445 = vlaneseq
        %v446 = vshrl.u32 %v445, 7
        %v447 = vsub.s32 1, %v446
        %v448 = vrot.slane %v439, %v447
        %v449 = vlaneseq
        %v450 = vshrl.u32 %v449, 7
        %v451 = vsub.s32 2, %v450
        %v452 = vrot.slane %v439, %v451
        %v488 = vunpack.c.l.b16 %v407
        %v489 = vunpack.c.h.b16 %v407
        %v490 = vunpack.c.l.b16 %v408
        %v491 = vunpack.c.l.b16 %v409
        %v492 = vunpack.c.h.b16 %v409
        %v493 = vunpack.c.l.b16 %v410
        %v494 = vunpack.c.l.b16 %v411
        %v495 = vunpack.c.h.b16 %v411
        %v496 = vunpack.c.l.b16 %v412
        %v497 = vunpack.c.l.b16 %v413
        %v498 = vunpack.c.h.b16 %v413
        %v499 = vunpack.c.l.b16 %v414
        %v500 = vunpack.c.l.b16 %v415
        %v501 = vunpack.c.h.b16 %v415
        %v502 = vunpack.c.l.b16 %v416
        %v503 = vunpack.c.l.b16 %v417
        %v504 = vunpack.c.h.b16 %v417
        %v505 = vunpack.c.l.b16 %v418
        %v506 = vunpack.c.l.b16 %v419
        %v507 = vunpack.c.h.b16 %v419
        %v508 = vunpack.c.l.b16 %v420
        %v509 = vunpack.c.l.b16 %v421
        %v510 = vunpack.c.h.b16 %v421
        %v511 = vunpack.c.l.b16 %v422
        %v512 = vunpack.c.l.b16 %v423
        %v513 = vunpack.c.h.b16 %v423
        %v514 = vunpack.c.l.b16 %v424
        %v515 = vunpack.c.l.b16 %v425
        %v516 = vunpack.c.h.b16 %v425
        %v517 = vunpack.c.l.b16 %v426
        %v518 = vunpack.c.l.b16 %v427
        %v519 = vunpack.c.h.b16 %v427
        %v520 = vunpack.c.l.b16 %v428
        %v521 = vunpack.c.l.b16 %v429
        %v522 = vunpack.c.h.b16 %v429
        %v523 = vunpack.c.l.b16 %v430
        %v524 = vunpack.c.l.b16 %v431
        %v525 = vunpack.c.h.b16 %v431
        %v526 = vunpack.c.l.b16 %v432
        %v527 = vunpack.c.l.b16 %v433
        %v528 = vunpack.c.h.b16 %v433
        %v529 = vunpack.c.l.b16 %v434
        %v530 = vunpack.c.l.b16 %v435
        %v531 = vunpack.c.h.b16 %v435
        %v532 = vunpack.c.l.b16 %v436
        %v533 = vunpack.c.l.b16 %v437
        %v534 = vunpack.c.h.b16 %v437
        %v535 = vunpack.c.l.b16 %v438
        %v536 = vpack.c.b16 %v491, %v488
        %v537 = vpack.c.b16 %v492, %v489
        %v538 = vpack.c.b16 %v493, %v490
        %v539 = vpack.c.b16 %v497, %v494
        %v540 = vpack.c.b16 %v498, %v495
        %v541 = vpack.c.b16 %v499, %v496
        %v542 = vpack.c.b16 %v503, %v500
        %v543 = vpack.c.b16 %v504, %v501
        %v544 = vpack.c.b16 %v505, %v502
        %v545 = vpack.c.b16 %v509, %v506
        %v546 = vpack.c.b16 %v510, %v507
        %v547 = vpack.c.b16 %v511, %v508
        %v548 = vpack.c.b16 %v515, %v512
        %v549 = vpack.c.b16 %v516, %v513
        %v550 = vpack.c.b16 %v517, %v514
        %v551 = vpack.c.b16 %v521, %v518
        %v552 = vpack.c.b16 %v522, %v519
        %v553 = vpack.c.b16 %v523, %v520
        %v554 = vpack.c.b16 %v527, %v524
        %v555 = vpack.c.b16 %v528, %v525
        %v556 = vpack.c.b16 %v529, %v526
        %v557 = vpack.c.b16 %v533, %v530
        %v558 = vpack.c.b16 %v534, %v531
        %v559 = vpack.c.b16 %v535, %v532
        %584 = vmatprep.subr.bf16.mxu0 %v537
        %585 = vmatpush1.bf16.msra.mxu0 %v536
        %586 = vmatprep.subr.bf16.mxu0 %v540
        %587 = vmatpush1.bf16.msra.mxu0 %v539
        %588 = vmatprep.subr.bf16.mxu0 %v543
        %589 = vmatpush1.bf16.msra.mxu0 %v542
        %590 = vmatprep.subr.bf16.mxu0 %v546
        %591 = vmatpush1.bf16.msra.mxu0 %v545
        %592 = vmatprep.subr.bf16.mxu0 %v549
        %593 = vmatpush1.bf16.msra.mxu0 %v548
        %594 = vmatprep.subr.bf16.mxu0 %v552
        %595 = vmatpush1.bf16.msra.mxu0 %v551
        %596 = vmatprep.subr.bf16.mxu0 %v555
        %597 = vmatpush1.bf16.msra.mxu0 %v554
        %598 = vmatprep.subr.bf16.mxu0 %v558
        %599 = vmatpush1.bf16.msra.mxu0 %v557
        %600 = vmatprep.subr.bf16.mxu0 0
        %601 = vmatpush1.bf16.msra.mxu0 0
        %602 = vmatprep.subr.bf16.mxu0 0
        %603 = vmatpush1.bf16.msra.mxu0 0
        %604 = vmatprep.subr.bf16.mxu0 0
        %605 = vmatpush1.bf16.msra.mxu0 0
        %606 = vmatprep.subr.bf16.mxu0 0
        %607 = vmatpush1.bf16.msra.mxu0 0
        %608 = vmatprep.subr.bf16.mxu0 0
        %609 = vmatpush1.bf16.msra.mxu0 0
        %610 = vmatprep.subr.bf16.mxu0 0
        %611 = vmatpush1.bf16.msra.mxu0 0
        %612 = vmatprep.subr.bf16.mxu0 0
        %613 = vmatpush1.bf16.msra.mxu0 0
        %614 = vmatprep.subr.bf16.mxu0 0
        %615 = vmatpush1.bf16.msra.mxu0 0
        %616 = vmatprep.mubr.bf16.mxu0 0
        %617 = vmatmul.mubr.bf16.gmra.mrb[0].mxu0 %v403
        %v618 = vpop.f32.mrb[0].mxu0
        %v619 = vadd.f32 %v444, %v618
        %v620 = vpop.f32.mrb[0].mxu0
        %v621 = vadd.f32 %v448, %v620
        %v622 = vpop.f32.mrb[0].mxu0
        %v623 = vadd.f32 %v444, %v622
        %v624 = vpop.f32.mrb[0].mxu0
        %v625 = vadd.f32 %v448, %v624
        %626 = vmatprep.mubr.bf16.mxu0 0
        %627 = vmatmul.mubr.bf16.gmra.mrb[0].mxu0 %v404
        %v628 = vpop.f32.mrb[0].mxu0
        %v629 = vadd.f32 %v444, %v628
        %v630 = vpop.f32.mrb[0].mxu0
        %v631 = vadd.f32 %v448, %v630
        %v632 = vpop.f32.mrb[0].mxu0
        %v633 = vadd.f32 %v444, %v632
        %v634 = vpop.f32.mrb[0].mxu0
        %v635 = vadd.f32 %v448, %v634
        %636 = vmatprep.mubr.bf16.mxu0 0
        %637 = vmatmul.mubr.bf16.gmra.mrb[0].mxu0 %v405
        %v638 = vpop.f32.mrb[0].mxu0
        %v639 = vadd.f32 %v444, %v638
        %v640 = vpop.f32.mrb[0].mxu0
        %v641 = vadd.f32 %v448, %v640
        %v642 = vpop.f32.mrb[0].mxu0
        %v643 = vadd.f32 %v444, %v642
        %v644 = vpop.f32.mrb[0].mxu0
        %v645 = vadd.f32 %v448, %v644
        %646 = vmatprep.mubr.bf16.mxu0 0
        %647 = vmatmul.mubr.bf16.gmra.mrb[0].mxu0 %v406
        %v648 = vpop.f32.mrb[0].mxu0
        %v649 = vadd.f32 %v444, %v648
        %v650 = vpop.f32.mrb[0].mxu0
        %v651 = vadd.f32 %v448, %v650
        %v652 = vpop.f32.mrb[0].mxu0
        %v653 = vadd.f32 %v444, %v652
        %v654 = vpop.f32.mrb[0].mxu0
        %v655 = vadd.f32 %v448, %v654
        %656 = vdwg.mxu0
        %657 = vmatprep.subr.bf16.mxu0 0
        %658 = vmatpush1.bf16.msra.mxu0 %v538
        %659 = vmatprep.subr.bf16.mxu0 0
        %660 = vmatpush1.bf16.msra.mxu0 %v541
        %661 = vmatprep.subr.bf16.mxu0 0
        %662 = vmatpush1.bf16.msra.mxu0 %v544
        %663 = vmatprep.subr.bf16.mxu0 0
        %664 = vmatpush1.bf16.msra.mxu0 %v547
        %665 = vmatprep.subr.bf16.mxu0 0
        %666 = vmatpush1.bf16.msra.mxu0 %v550
        %667 = vmatprep.subr.bf16.mxu0 0
        %668 = vmatpush1.bf16.msra.mxu0 %v553
        %669 = vmatprep.subr.bf16.mxu0 0
        %670 = vmatpush1.bf16.msra.mxu0 %v556
        %671 = vmatprep.subr.bf16.mxu0 0
        %672 = vmatpush1.bf16.msra.mxu0 %v559
        %673 = vmatprep.subr.bf16.mxu0 0
        %674 = vmatpush1.bf16.msra.mxu0 0
        %675 = vmatprep.subr.bf16.mxu0 0
        %676 = vmatpush1.bf16.msra.mxu0 0
        %677 = vmatprep.subr.bf16.mxu0 0
        %678 = vmatpush1.bf16.msra.mxu0 0
        %679 = vmatprep.subr.bf16.mxu0 0
        %680 = vmatpush1.bf16.msra.mxu0 0
        %681 = vmatprep.subr.bf16.mxu0 0
        %682 = vmatpush1.bf16.msra.mxu0 0
        %683 = vmatprep.subr.bf16.mxu0 0
        %684 = vmatpush1.bf16.msra.mxu0 0
        %685 = vmatprep.subr.bf16.mxu0 0
        %686 = vmatpush1.bf16.msra.mxu0 0
        %687 = vmatprep.subr.bf16.mxu0 0
        %688 = vmatpush1.bf16.msra.mxu0 0
        %689 = vmatprep.mubr.bf16.mxu0 0
        %690 = vmatmul.mubr.bf16.gmra.mrb[0].mxu0 %v403
        %v691 = vpop.f32.mrb[0].mxu0
        %v692 = vadd.f32 %v452, %v691
        %v693 = vpop.f32.mrb[0].mxu0
        %v694 = vpop.f32.mrb[0].mxu0
        %v695 = vadd.f32 %v452, %v694
        %v696 = vpop.f32.mrb[0].mxu0
        %697 = vmatprep.mubr.bf16.mxu0 0
        %698 = vmatmul.mubr.bf16.gmra.mrb[0].mxu0 %v404
        %v699 = vpop.f32.mrb[0].mxu0
        %v700 = vadd.f32 %v452, %v699
        %v701 = vpop.f32.mrb[0].mxu0
        %v702 = vpop.f32.mrb[0].mxu0
        %v703 = vadd.f32 %v452, %v702
        %v704 = vpop.f32.mrb[0].mxu0
        %705 = vmatprep.mubr.bf16.mxu0 0
        %706 = vmatmul.mubr.bf16.gmra.mrb[0].mxu0 %v405
        %v707 = vpop.f32.mrb[0].mxu0
        %v708 = vadd.f32 %v452, %v707
        %v709 = vpop.f32.mrb[0].mxu0
        %v710 = vpop.f32.mrb[0].mxu0
        %v711 = vadd.f32 %v452, %v710
        %v712 = vpop.f32.mrb[0].mxu0
        %713 = vmatprep.mubr.bf16.mxu0 0
        %714 = vmatmul.mubr.bf16.gmra.mrb[0].mxu0 %v406
        %v715 = vpop.f32.mrb[0].mxu0
        %v716 = vadd.f32 %v452, %v715
        %v717 = vpop.f32.mrb[0].mxu0
        %v718 = vpop.f32.mrb[0].mxu0
        %v719 = vadd.f32 %v452, %v718
        %v720 = vpop.f32.mrb[0].mxu0
        %721 = vdwg.mxu0
        %722 = vst [vmem:[#allocation2] sm:$0xff] %v619
        %723 = vst [vmem:[#allocation2 + $0x8] sm:$0xff] %v621
        %724 = vst [vmem:[#allocation2 + $0x10] sm:$0xff] %v692
        %725 = vst [vmem:[#allocation2 + $0x18] sm:$0xff] %v623
        %726 = vst [vmem:[#allocation2 + $0x20] sm:$0xff] %v625
        %727 = vst [vmem:[#allocation2 + $0x28] sm:$0xff] %v695
        %728 = vst [vmem:[#allocation2 + $0x30] sm:$0xff] %v629
        %729 = vst [vmem:[#allocation2 + $0x38] sm:$0xff] %v631
        %730 = vst [vmem:[#allocation2 + $0x40] sm:$0xff] %v700
        %731 = vst [vmem:[#allocation2 + $0x48] sm:$0xff] %v633
        %732 = vst [vmem:[#allocation2 + $0x50] sm:$0xff] %v635
        %733 = vst [vmem:[#allocation2 + $0x58] sm:$0xff] %v703
        %734 = vst [vmem:[#allocation2 + $0x60] sm:$0xff] %v639
        %735 = vst [vmem:[#allocation2 + $0x68] sm:$0xff] %v641
        %736 = vst [vmem:[#allocation2 + $0x70] sm:$0xff] %v708
        %737 = vst [vmem:[#allocation2 + $0x78] sm:$0xff] %v643
        %738 = vst [vmem:[#allocation2 + $0x80] sm:$0xff] %v645
        %739 = vst [vmem:[#allocation2 + $0x88] sm:$0xff] %v711
        %740 = vst [vmem:[#allocation2 + $0x90] sm:$0xff] %v649
        %741 = vst [vmem:[#allocation2 + $0x98] sm:$0xff] %v651
        %742 = vst [vmem:[#allocation2 + $0xa0] sm:$0xff] %v716
        %743 = vst [vmem:[#allocation2 + $0xa8] sm:$0xff] %v653
        %744 = vst [vmem:[#allocation2 + $0xb0] sm:$0xff] %v655
        %745 = vst [vmem:[#allocation2 + $0xb8] sm:$0xff] %v719
        %v746 = vld [vmem:[%s337] sm:$0xff]
        %v747 = vld [vmem:[%s337 + $0x8] sm:$0xf]
        %v748 = vld [vmem:[%s337 + $0xc] sm:$0xff]
        %v749 = vld [vmem:[%s337 + $0x14] sm:$0xf]
        %v750 = vld [vmem:[%s337 + $0x18] sm:$0xff]
        %v751 = vld [vmem:[%s337 + $0x20] sm:$0xf]
        %v752 = vld [vmem:[%s337 + $0x24] sm:$0xff]
        %v753 = vld [vmem:[%s337 + $0x2c] sm:$0xf]
        %v754 = vld [vmem:[%s337 + $0x30] sm:$0xff]
        %v755 = vld [vmem:[%s337 + $0x38] sm:$0xf]
        %v756 = vld [vmem:[%s337 + $0x3c] sm:$0xff]
        %v757 = vld [vmem:[%s337 + $0x44] sm:$0xf]
        %v758 = vld [vmem:[%s337 + $0x48] sm:$0xff]
        %v759 = vld [vmem:[%s337 + $0x50] sm:$0xf]
        %v760 = vld [vmem:[%s337 + $0x54] sm:$0xff]
        %v761 = vld [vmem:[%s337 + $0x5c] sm:$0xf]
        %v762 = vld [vmem:[%s337 + $0x60] sm:$0xff]
        %v763 = vld [vmem:[%s337 + $0x68] sm:$0xf]
        %v764 = vld [vmem:[%s337 + $0x6c] sm:$0xff]
        %v765 = vld [vmem:[%s337 + $0x74] sm:$0xf]
        %v766 = vld [vmem:[%s337 + $0x78] sm:$0xff]
        %v767 = vld [vmem:[%s337 + $0x80] sm:$0xf]
        %v768 = vld [vmem:[%s337 + $0x84] sm:$0xff]
        %v769 = vld [vmem:[%s337 + $0x8c] sm:$0xf]
        %v770 = vld [vmem:[%s337 + $0x90] sm:$0xff]
        %v771 = vld [vmem:[%s337 + $0x98] sm:$0xf]
        %v772 = vld [vmem:[%s337 + $0x9c] sm:$0xff]
        %v773 = vld [vmem:[%s337 + $0xa4] sm:$0xf]
        %v774 = vld [vmem:[%s337 + $0xa8] sm:$0xff]
        %v775 = vld [vmem:[%s337 + $0xb0] sm:$0xf]
        %v776 = vld [vmem:[%s337 + $0xb4] sm:$0xff]
        %v777 = vld [vmem:[%s337 + $0xbc] sm:$0xf]
        %v778 = vld [vmem:[%s393] sm:$0x7]
        %v779 = vld [vmem:[%s0] sm:$0xff]
        %s780 = smul.u32 %s29, 7
        %s781 = smul.u32 %s29, 56
        %s782 = sshra.s32 %s781, 3
        %s783 = sand.u32 %s781, 7
        %s784 = smul.u32 %s782, 3
        %s785 = smul.addr %s784, 8
        %s786 = scalar_lea.vmem [#allocation2], %s785
        %v787 = vld [vmem:[%s786] sm:$0xff]
        %v788 = vld [vmem:[%s786 + $0x8] sm:$0xff]
        %v789 = vld [vmem:[%s786 + $0x10] sm:$0xff]
        %v791 = vlaneseq
        %v792 = vshrl.u32 %v791, 7
        %v793 = vsub.s32 0, %v792
        %v794 = vrot.slane %v778, %v793
        %v795 = vlaneseq
        %v796 = vshrl.u32 %v795, 7
        %v797 = vsub.s32 1, %v796
        %v798 = vrot.slane %v778, %v797
        %v799 = vlaneseq
        %v800 = vshrl.u32 %v799, 7
        %v801 = vsub.s32 2, %v800
        %v802 = vrot.slane %v778, %v801
        %v838 = vunpack.c.l.b16 %v746
        %v839 = vunpack.c.h.b16 %v746
        %v840 = vunpack.c.l.b16 %v747
        %v841 = vunpack.c.l.b16 %v748
        %v842 = vunpack.c.h.b16 %v748
        %v843 = vunpack.c.l.b16 %v749
        %v844 = vunpack.c.l.b16 %v750
        %v845 = vunpack.c.h.b16 %v750
        %v846 = vunpack.c.l.b16 %v751
        %v847 = vunpack.c.l.b16 %v752
        %v848 = vunpack.c.h.b16 %v752
        %v849 = vunpack.c.l.b16 %v753
        %v850 = vunpack.c.l.b16 %v754
        %v851 = vunpack.c.h.b16 %v754
        %v852 = vunpack.c.l.b16 %v755
        %v853 = vunpack.c.l.b16 %v756
        %v854 = vunpack.c.h.b16 %v756
        %v855 = vunpack.c.l.b16 %v757
        %v856 = vunpack.c.l.b16 %v758
        %v857 = vunpack.c.h.b16 %v758
        %v858 = vunpack.c.l.b16 %v759
        %v859 = vunpack.c.l.b16 %v760
        %v860 = vunpack.c.h.b16 %v760
        %v861 = vunpack.c.l.b16 %v761
        %v862 = vunpack.c.l.b16 %v762
        %v863 = vunpack.c.h.b16 %v762
        %v864 = vunpack.c.l.b16 %v763
        %v865 = vunpack.c.l.b16 %v764
        %v866 = vunpack.c.h.b16 %v764
        %v867 = vunpack.c.l.b16 %v765
        %v868 = vunpack.c.l.b16 %v766
        %v869 = vunpack.c.h.b16 %v766
        %v870 = vunpack.c.l.b16 %v767
        %v871 = vunpack.c.l.b16 %v768
        %v872 = vunpack.c.h.b16 %v768
        %v873 = vunpack.c.l.b16 %v769
        %v874 = vunpack.c.l.b16 %v770
        %v875 = vunpack.c.h.b16 %v770
        %v876 = vunpack.c.l.b16 %v771
        %v877 = vunpack.c.l.b16 %v772
        %v878 = vunpack.c.h.b16 %v772
        %v879 = vunpack.c.l.b16 %v773
        %v880 = vunpack.c.l.b16 %v774
        %v881 = vunpack.c.h.b16 %v774
        %v882 = vunpack.c.l.b16 %v775
        %v883 = vunpack.c.l.b16 %v776
        %v884 = vunpack.c.h.b16 %v776
        %v885 = vunpack.c.l.b16 %v777
        %v886 = vpack.c.b16 %v841, %v838
        %v887 = vpack.c.b16 %v842, %v839
        %v888 = vpack.c.b16 %v843, %v840
        %v889 = vpack.c.b16 %v847, %v844
        %v890 = vpack.c.b16 %v848, %v845
        %v891 = vpack.c.b16 %v849, %v846
        %v892 = vpack.c.b16 %v853, %v850
        %v893 = vpack.c.b16 %v854, %v851
        %v894 = vpack.c.b16 %v855, %v852
        %v895 = vpack.c.b16 %v859, %v856
        %v896 = vpack.c.b16 %v860, %v857
        %v897 = vpack.c.b16 %v861, %v858
        %v898 = vpack.c.b16 %v865, %v862
        %v899 = vpack.c.b16 %v866, %v863
        %v900 = vpack.c.b16 %v867, %v864
        %v901 = vpack.c.b16 %v871, %v868
        %v902 = vpack.c.b16 %v872, %v869
        %v903 = vpack.c.b16 %v873, %v870
        %v904 = vpack.c.b16 %v877, %v874
        %v905 = vpack.c.b16 %v878, %v875
        %v906 = vpack.c.b16 %v879, %v876
        %v907 = vpack.c.b16 %v883, %v880
        %v908 = vpack.c.b16 %v884, %v881
        %v909 = vpack.c.b16 %v885, %v882
        %934 = vmatprep.subr.bf16.mxu0 %v887
        %935 = vmatpush1.bf16.msra.mxu0 %v886
        %936 = vmatprep.subr.bf16.mxu0 %v890
        %937 = vmatpush1.bf16.msra.mxu0 %v889
        %938 = vmatprep.subr.bf16.mxu0 %v893
        %939 = vmatpush1.bf16.msra.mxu0 %v892
        %940 = vmatprep.subr.bf16.mxu0 %v896
        %941 = vmatpush1.bf16.msra.mxu0 %v895
        %942 = vmatprep.subr.bf16.mxu0 %v899
        %943 = vmatpush1.bf16.msra.mxu0 %v898
        %944 = vmatprep.subr.bf16.mxu0 %v902
        %945 = vmatpush1.bf16.msra.mxu0 %v901
        %946 = vmatprep.subr.bf16.mxu0 %v905
        %947 = vmatpush1.bf16.msra.mxu0 %v904
        %948 = vmatprep.subr.bf16.mxu0 %v908
        %949 = vmatpush1.bf16.msra.mxu0 %v907
        %950 = vmatprep.subr.bf16.mxu0 0
        %951 = vmatpush1.bf16.msra.mxu0 0
        %952 = vmatprep.subr.bf16.mxu0 0
        %953 = vmatpush1.bf16.msra.mxu0 0
        %954 = vmatprep.subr.bf16.mxu0 0
        %955 = vmatpush1.bf16.msra.mxu0 0
        %956 = vmatprep.subr.bf16.mxu0 0
        %957 = vmatpush1.bf16.msra.mxu0 0
        %958 = vmatprep.subr.bf16.mxu0 0
        %959 = vmatpush1.bf16.msra.mxu0 0
        %960 = vmatprep.subr.bf16.mxu0 0
        %961 = vmatpush1.bf16.msra.mxu0 0
        %962 = vmatprep.subr.bf16.mxu0 0
        %963 = vmatpush1.bf16.msra.mxu0 0
        %964 = vmatprep.subr.bf16.mxu0 0
        %965 = vmatpush1.bf16.msra.mxu0 0
        %966 = vmatprep.mubr.bf16.mxu0 0
        %967 = vmatmul.mubr.bf16.gmra.mrb[0].mxu0 0
        %v968 = vpop.f32.mrb[0].mxu0
        %v969 = vadd.f32 %v794, %v968
        %v970 = vpop.f32.mrb[0].mxu0
        %v971 = vadd.f32 %v798, %v970
        %v972 = vpop.f32.mrb[0].mxu0
        %v973 = vpop.f32.mrb[0].mxu0
        %974 = vdwg.mxu0
        %975 = vmatprep.subr.bf16.mxu0 0
        %976 = vmatpush1.bf16.msra.mxu0 %v888
        %977 = vmatprep.subr.bf16.mxu0 0
        %978 = vmatpush1.bf16.msra.mxu0 %v891
        %979 = vmatprep.subr.bf16.mxu0 0
        %980 = vmatpush1.bf16.msra.mxu0 %v894
        %981 = vmatprep.subr.bf16.mxu0 0
        %982 = vmatpush1.bf16.msra.mxu0 %v897
        %983 = vmatprep.subr.bf16.mxu0 0
        %984 = vmatpush1.bf16.msra.mxu0 %v900
        %985 = vmatprep.subr.bf16.mxu0 0
        %986 = vmatpush1.bf16.msra.mxu0 %v903
        %987 = vmatprep.subr.bf16.mxu0 0
        %988 = vmatpush1.bf16.msra.mxu0 %v906
        %989 = vmatprep.subr.bf16.mxu0 0
        %990 = vmatpush1.bf16.msra.mxu0 %v909
        %991 = vmatprep.subr.bf16.mxu0 0
        %992 = vmatpush1.bf16.msra.mxu0 0
        %993 = vmatprep.subr.bf16.mxu0 0
        %994 = vmatpush1.bf16.msra.mxu0 0
        %995 = vmatprep.subr.bf16.mxu0 0
        %996 = vmatpush1.bf16.msra.mxu0 0
        %997 = vmatprep.subr.bf16.mxu0 0
        %998 = vmatpush1.bf16.msra.mxu0 0
        %999 = vmatprep.subr.bf16.mxu0 0
        %1000 = vmatpush1.bf16.msra.mxu0 0
        %1001 = vmatprep.subr.bf16.mxu0 0
        %1002 = vmatpush1.bf16.msra.mxu0 0
        %1003 = vmatprep.subr.bf16.mxu0 0
        %1004 = vmatpush1.bf16.msra.mxu0 0
        %1005 = vmatprep.subr.bf16.mxu0 0
        %1006 = vmatpush1.bf16.msra.mxu0 0
        %1007 = vmatprep.mubr.bf16.mxu0 0
        %1008 = vmatmul.mubr.bf16.gmra.mrb[0].mxu0 0
        %v1009 = vpop.f32.mrb[0].mxu0
        %v1010 = vadd.f32 %v802, %v1009
        %v1011 = vpop.f32.mrb[0].mxu0
        %v1012 = vpop.f32.mrb[0].mxu0
        %v1013 = vpop.f32.mrb[0].mxu0
        %1014 = vdwg.mxu0
        %v1015 = vadd.f32 %v787, %v969
        %v1016 = vxor.u32 %v1015, 2147483648
        %v1017 = vmul.f32 %v1016, 1.442695
        %v1018 = vpow.pop %v1017
        %v1019 = vadd.f32 %v1018, 1.0
        %v1020 = vrcp.pop %v1019
        %v1021 = vmul.f32 1.0, %v1020
        %v1022 = vadd.f32 %v788, %v971
        %v1023 = vxor.u32 %v1022, 2147483648
        %v1024 = vmul.f32 %v1023, 1.442695
        %v1025 = vpow.pop %v1024
        %v1026 = vadd.f32 %v1025, 1.0
        %v1027 = vrcp.pop %v1026
        %v1028 = vmul.f32 1.0, %v1027
        %v1029 = vmul.f32 %v1021, %v1010
        %v1030 = vadd.f32 %v789, %v1029
        %v1031 = vtanh.pop %v1030
        %v1032 = vsub.f32 1.0, %v1028
        %v1033 = vmul.f32 %v1032, %v1031
        %v1034 = vmul.f32 %v1028, 0.0
        %v1035 = vadd.f32 %v1033, %v1034
        %v1036 = vstv %s780
        %vm1037 = vcmp.lt.s32.totalorder %v1036, %v779
        %v1038 = vsel %vm1037, 1, 0
        %1039 = vset.pattern.permute.xlu0 0
        %1040 = vperm.xlu0 %1039, %v1038
        %v1041 = vpop.permute.xlu0 %1040
        %vm1042 = vcmp.eq.s32.totalorder %v1041, 1
        %v1043 = vsel %vm1042, %v1035, 0.0
        %s1044 = smul.u32 %s780, 8
        %s1045 = scalar_lea.vmem %s378, %s1044 [#allocation9]
        %1046 = vst [vmem:[%s1045] sm:$0xff] %v1043
        %s1047 = ssub.s32 1, %s29
        %s1048 = smul.u32 %s29, 6
        %s1049 = sadd.s32 %s1047, %s1048
        %s1050 = smul.u32 %s1049, 8
        %s1051 = sshra.s32 %s1050, 3
        %s1052 = sand.u32 %s1050, 7
        %s1053 = smul.u32 %s1051, 3
        %s1054 = smul.addr %s1053, 8
        %s1055 = scalar_lea.vmem [#allocation2], %s1054
        %v1056 = vld [vmem:[%s1055] sm:$0xff]
        %v1057 = vld [vmem:[%s1055 + $0x8] sm:$0xff]
        %v1058 = vld [vmem:[%s1055 + $0x10] sm:$0xff]
        %v1059 = vpack.c.bf16 %v1043, %v1043
        %1060 = vmatprep.subr.bf16.mxu0 %v887
        %1061 = vmatpush1.bf16.msra.mxu0 %v886
        %1062 = vmatprep.subr.bf16.mxu0 %v890
        %1063 = vmatpush1.bf16.msra.mxu0 %v889
        %1064 = vmatprep.subr.bf16.mxu0 %v893
        %1065 = vmatpush1.bf16.msra.mxu0 %v892
        %1066 = vmatprep.subr.bf16.mxu0 %v896
        %1067 = vmatpush1.bf16.msra.mxu0 %v895
        %1068 = vmatprep.subr.bf16.mxu0 %v899
        %1069 = vmatpush1.bf16.msra.mxu0 %v898
        %1070 = vmatprep.subr.bf16.mxu0 %v902
        %1071 = vmatpush1.bf16.msra.mxu0 %v901
        %1072 = vmatprep.subr.bf16.mxu0 %v905
        %1073 = vmatpush1.bf16.msra.mxu0 %v904
        %1074 = vmatprep.subr.bf16.mxu0 %v908
        %1075 = vmatpush1.bf16.msra.mxu0 %v907
        %1076 = vmatprep.subr.bf16.mxu0 0
        %1077 = vmatpush1.bf16.msra.mxu0 0
        %1078 = vmatprep.subr.bf16.mxu0 0
        %1079 = vmatpush1.bf16.msra.mxu0 0
        %1080 = vmatprep.subr.bf16.mxu0 0
        %1081 = vmatpush1.bf16.msra.mxu0 0
        %1082 = vmatprep.subr.bf16.mxu0 0
        %1083 = vmatpush1.bf16.msra.mxu0 0
        %1084 = vmatprep.subr.bf16.mxu0 0
        %1085 = vmatpush1.bf16.msra.mxu0 0
        %1086 = vmatprep.subr.bf16.mxu0 0
        %1087 = vmatpush1.bf16.msra.mxu0 0
        %1088 = vmatprep.subr.bf16.mxu0 0
        %1089 = vmatpush1.bf16.msra.mxu0 0
        %1090 = vmatprep.subr.bf16.mxu0 0
        %1091 = vmatpush1.bf16.msra.mxu0 0
        %1092 = vmatprep.mubr.bf16.mxu0 0
        %1093 = vmatmul.mubr.bf16.gmra.mrb[0].mxu0 %v1059
        %v1094 = vpop.f32.mrb[0].mxu0
        %v1095 = vadd.f32 %v794, %v1094
        %v1096 = vpop.f32.mrb[0].mxu0
        %v1097 = vadd.f32 %v798, %v1096
        %v1098 = vpop.f32.mrb[0].mxu0
        %v1099 = vpop.f32.mrb[0].mxu0
        %1100 = vdwg.mxu0
        %1101 = vmatprep.subr.bf16.mxu0 0
        %1102 = vmatpush1.bf16.msra.mxu0 %v888
        %1103 = vmatprep.subr.bf16.mxu0 0
        %1104 = vmatpush1.bf16.msra.mxu0 %v891
        %1105 = vmatprep.subr.bf16.mxu0 0
        %1106 = vmatpush1.bf16.msra.mxu0 %v894
        %1107 = vmatprep.subr.bf16.mxu0 0
        %1108 = vmatpush1.bf16.msra.mxu0 %v897
        %1109 = vmatprep.subr.bf16.mxu0 0
        %1110 = vmatpush1.bf16.msra.mxu0 %v900
        %1111 = vmatprep.subr.bf16.mxu0 0
        %1112 = vmatpush1.bf16.msra.mxu0 %v903
        %1113 = vmatprep.subr.bf16.mxu0 0
        %1114 = vmatpush1.bf16.msra.mxu0 %v906
        %1115 = vmatprep.subr.bf16.mxu0 0
        %1116 = vmatpush1.bf16.msra.mxu0 %v909
        %1117 = vmatprep.subr.bf16.mxu0 0
        %1118 = vmatpush1.bf16.msra.mxu0 0
        %1119 = vmatprep.subr.bf16.mxu0 0
        %1120 = vmatpush1.bf16.msra.mxu0 0
        %1121 = vmatprep.subr.bf16.mxu0 0
        %1122 = vmatpush1.bf16.msra.mxu0 0
        %1123 = vmatprep.subr.bf16.mxu0 0
        %1124 = vmatpush1.bf16.msra.mxu0 0
        %1125 = vmatprep.subr.bf16.mxu0 0
        %1126 = vmatpush1.bf16.msra.mxu0 0
        %1127 = vmatprep.subr.bf16.mxu0 0
        %1128 = vmatpush1.bf16.msra.mxu0 0
        %1129 = vmatprep.subr.bf16.mxu0 0
        %1130 = vmatpush1.bf16.msra.mxu0 0
        %1131 = vmatprep.subr.bf16.mxu0 0
        %1132 = vmatpush1.bf16.msra.mxu0 0
        %1133 = vmatprep.mubr.bf16.mxu0 0
        %1134 = vmatmul.mubr.bf16.gmra.mrb[0].mxu0 %v1059
        %v1135 = vpop.f32.mrb[0].mxu0
        %v1136 = vadd.f32 %v802, %v1135
        %v1137 = vpop.f32.mrb[0].mxu0
        %v1138 = vpop.f32.mrb[0].mxu0
        %v1139 = vpop.f32.mrb[0].mxu0
        %1140 = vdwg.mxu0
        %v1141 = vadd.f32 %v1056, %v1095
        %v1142 = vxor.u32 %v1141, 2147483648
        %v1143 = vmul.f32 %v1142, 1.442695
        %v1144 = vpow.pop %v1143
        %v1145 = vadd.f32 %v1144, 1.0
        %v1146 = vrcp.pop %v1145
        %v1147 = vmul.f32 1.0, %v1146
        %v1148 = vadd.f32 %v1057, %v1097
        %v1149 = vxor.u32 %v1148, 2147483648
        %v1150 = vmul.f32 %v1149, 1.442695
        %v1151 = vpow.pop %v1150
        %v1152 = vadd.f32 %v1151, 1.0
        %v1153 = vrcp.pop %v1152
        %v1154 = vmul.f32 1.0, %v1153
        %v1155 = vmul.f32 %v1147, %v1136
        %v1156 = vadd.f32 %v1058, %v1155
        %v1157 = vtanh.pop %v1156
        %v1158 = vsub.f32 1.0, %v1154
        %v1159 = vmul.f32 %v1158, %v1157
        %v1160 = vmul.f32 %v1154, %v1043
        %v1161 = vadd.f32 %v1159, %v1160
        %v1162 = vstv %s1049
        %vm1163 = vcmp.lt.s32.totalorder %v1162, %v779
        %v1164 = vsel %vm1163, 1, 0
        %1165 = vset.pattern.permute.xlu0 0
        %1166 = vperm.xlu0 %1165, %v1164
        %v1167 = vpop.permute.xlu0 %1166
        %vm1168 = vcmp.eq.s32.totalorder %v1167, 1
        %v1169 = vsel %vm1168, %v1161, %v1043
        %v1170 = vsel %vm1168, %v1161, 0.0
        %s1171 = scalar_lea.vmem %s378, %s1050 [#allocation9]
        %1172 = vst [vmem:[%s1171] sm:$0xff] %v1170
        %s1173 = smul.u32 %s1047, 2
        %s1174 = smul.u32 %s29, 5
        %s1175 = sadd.s32 %s1173, %s1174
        %s1176 = smul.u32 %s1175, 8
        %s1177 = sshra.s32 %s1176, 3
        %s1178 = sand.u32 %s1176, 7
        %s1179 = smul.u32 %s1177, 3
        %s1180 = smul.addr %s1179, 8
        %s1181 = scalar_lea.vmem [#allocation2], %s1180
        %v1182 = vld [vmem:[%s1181] sm:$0xff]
        %v1183 = vld [vmem:[%s1181 + $0x8] sm:$0xff]
        %v1184 = vld [vmem:[%s1181 + $0x10] sm:$0xff]
        %v1185 = vpack.c.bf16 %v1169, %v1169
        %1186 = vmatprep.subr.bf16.mxu0 %v887
        %1187 = vmatpush1.bf16.msra.mxu0 %v886
        %1188 = vmatprep.subr.bf16.mxu0 %v890
        %1189 = vmatpush1.bf16.msra.mxu0 %v889
        %1190 = vmatprep.subr.bf16.mxu0 %v893
        %1191 = vmatpush1.bf16.msra.mxu0 %v892
        %1192 = vmatprep.subr.bf16.mxu0 %v896
        %1193 = vmatpush1.bf16.msra.mxu0 %v895
        %1194 = vmatprep.subr.bf16.mxu0 %v899
        %1195 = vmatpush1.bf16.msra.mxu0 %v898
        %1196 = vmatprep.subr.bf16.mxu0 %v902
        %1197 = vmatpush1.bf16.msra.mxu0 %v901
        %1198 = vmatprep.subr.bf16.mxu0 %v905
        %1199 = vmatpush1.bf16.msra.mxu0 %v904
        %1200 = vmatprep.subr.bf16.mxu0 %v908
        %1201 = vmatpush1.bf16.msra.mxu0 %v907
        %1202 = vmatprep.subr.bf16.mxu0 0
        %1203 = vmatpush1.bf16.msra.mxu0 0
        %1204 = vmatprep.subr.bf16.mxu0 0
        %1205 = vmatpush1.bf16.msra.mxu0 0
        %1206 = vmatprep.subr.bf16.mxu0 0
        %1207 = vmatpush1.bf16.msra.mxu0 0
        %1208 = vmatprep.subr.bf16.mxu0 0
        %1209 = vmatpush1.bf16.msra.mxu0 0
        %1210 = vmatprep.subr.bf16.mxu0 0
        %1211 = vmatpush1.bf16.msra.mxu0 0
        %1212 = vmatprep.subr.bf16.mxu0 0
        %1213 = vmatpush1.bf16.msra.mxu0 0
        %1214 = vmatprep.subr.bf16.mxu0 0
        %1215 = vmatpush1.bf16.msra.mxu0 0
        %1216 = vmatprep.subr.bf16.mxu0 0
        %1217 = vmatpush1.bf16.msra.mxu0 0
        %1218 = vmatprep.mubr.bf16.mxu0 0
        %1219 = vmatmul.mubr.bf16.gmra.mrb[0].mxu0 %v1185
        %v1220 = vpop.f32.mrb[0].mxu0
        %v1221 = vadd.f32 %v794, %v1220
        %v1222 = vpop.f32.mrb[0].mxu0
        %v1223 = vadd.f32 %v798, %v1222
        %v1224 = vpop.f32.mrb[0].mxu0
        %v1225 = vpop.f32.mrb[0].mxu0
        %1226 = vdwg.mxu0
        %1227 = vmatprep.subr.bf16.mxu0 0
        %1228 = vmatpush1.bf16.msra.mxu0 %v888
        %1229 = vmatprep.subr.bf16.mxu0 0
        %1230 = vmatpush1.bf16.msra.mxu0 %v891
        %1231 = vmatprep.subr.bf16.mxu0 0
        %1232 = vmatpush1.bf16.msra.mxu0 %v894
        %1233 = vmatprep.subr.bf16.mxu0 0
        %1234 = vmatpush1.bf16.msra.mxu0 %v897
        %1235 = vmatprep.subr.bf16.mxu0 0
        %1236 = vmatpush1.bf16.msra.mxu0 %v900
        %1237 = vmatprep.subr.bf16.mxu0 0
        %1238 = vmatpush1.bf16.msra.mxu0 %v903
        %1239 = vmatprep.subr.bf16.mxu0 0
        %1240 = vmatpush1.bf16.msra.mxu0 %v906
        %1241 = vmatprep.subr.bf16.mxu0 0
        %1242 = vmatpush1.bf16.msra.mxu0 %v909
        %1243 = vmatprep.subr.bf16.mxu0 0
        %1244 = vmatpush1.bf16.msra.mxu0 0
        %1245 = vmatprep.subr.bf16.mxu0 0
        %1246 = vmatpush1.bf16.msra.mxu0 0
        %1247 = vmatprep.subr.bf16.mxu0 0
        %1248 = vmatpush1.bf16.msra.mxu0 0
        %1249 = vmatprep.subr.bf16.mxu0 0
        %1250 = vmatpush1.bf16.msra.mxu0 0
        %1251 = vmatprep.subr.bf16.mxu0 0
        %1252 = vmatpush1.bf16.msra.mxu0 0
        %1253 = vmatprep.subr.bf16.mxu0 0
        %1254 = vmatpush1.bf16.msra.mxu0 0
        %1255 = vmatprep.subr.bf16.mxu0 0
        %1256 = vmatpush1.bf16.msra.mxu0 0
        %1257 = vmatprep.subr.bf16.mxu0 0
        %1258 = vmatpush1.bf16.msra.mxu0 0
        %1259 = vmatprep.mubr.bf16.mxu0 0
        %1260 = vmatmul.mubr.bf16.gmra.mrb[0].mxu0 %v1185
        %v1261 = vpop.f32.mrb[0].mxu0
        %v1262 = vadd.f32 %v802, %v1261
        %v1263 = vpop.f32.mrb[0].mxu0
        %v1264 = vpop.f32.mrb[0].mxu0
        %v1265 = vpop.f32.mrb[0].mxu0
        %1266 = vdwg.mxu0
        %v1267 = vadd.f32 %v1182, %v1221
        %v1268 = vxor.u32 %v1267, 2147483648
        %v1269 = vmul.f32 %v1268, 1.442695
        %v1270 = vpow.pop %v1269
        %v1271 = vadd.f32 %v1270, 1.0
        %v1272 = vrcp.pop %v1271
        %v1273 = vmul.f32 1.0, %v1272
        %v1274 = vadd.f32 %v1183, %v1223
        %v1275 = vxor.u32 %v1274, 2147483648
        %v1276 = vmul.f32 %v1275, 1.442695
        %v1277 = vpow.pop %v1276
        %v1278 = vadd.f32 %v1277, 1.0
        %v1279 = vrcp.pop %v1278
        %v1280 = vmul.f32 1.0, %v1279
        %v1281 = vmul.f32 %v1273, %v1262
        %v1282 = vadd.f32 %v1184, %v1281
        %v1283 = vtanh.pop %v1282
        %v1284 = vsub.f32 1.0, %v1280
        %v1285 = vmul.f32 %v1284, %v1283
        %v1286 = vmul.f32 %v1280, %v1169
        %v1287 = vadd.f32 %v1285, %v1286
        %v1288 = vstv %s1175
        %vm1289 = vcmp.lt.s32.totalorder %v1288, %v779
        %v1290 = vsel %vm1289, 1, 0
        %1291 = vset.pattern.permute.xlu0 0
        %1292 = vperm.xlu0 %1291, %v1290
        %v1293 = vpop.permute.xlu0 %1292
        %vm1294 = vcmp.eq.s32.totalorder %v1293, 1
        %v1295 = vsel %vm1294, %v1287, %v1169
        %v1296 = vsel %vm1294, %v1287, 0.0
        %s1297 = scalar_lea.vmem %s378, %s1176 [#allocation9]
        %1298 = vst [vmem:[%s1297] sm:$0xff] %v1296
        %s1299 = smul.u32 %s1047, 3
        %s1300 = smul.u32 %s29, 4
        %s1301 = sadd.s32 %s1299, %s1300
        %s1302 = smul.u32 %s1301, 8
        %s1303 = sshra.s32 %s1302, 3
        %s1304 = sand.u32 %s1302, 7
        %s1305 = smul.u32 %s1303, 3
        %s1306 = smul.addr %s1305, 8
        %s1307 = scalar_lea.vmem [#allocation2], %s1306
        %v1308 = vld [vmem:[%s1307] sm:$0xff]
        %v1309 = vld [vmem:[%s1307 + $0x8] sm:$0xff]
        %v1310 = vld [vmem:[%s1307 + $0x10] sm:$0xff]
        %v1311 = vpack.c.bf16 %v1295, %v1295
        %1312 = vmatprep.subr.bf16.mxu0 %v887
        %1313 = vmatpush1.bf16.msra.mxu0 %v886
        %1314 = vmatprep.subr.bf16.mxu0 %v890
        %1315 = vmatpush1.bf16.msra.mxu0 %v889
        %1316 = vmatprep.subr.bf16.mxu0 %v893
        %1317 = vmatpush1.bf16.msra.mxu0 %v892
        %1318 = vmatprep.subr.bf16.mxu0 %v896
        %1319 = vmatpush1.bf16.msra.mxu0 %v895
        %1320 = vmatprep.subr.bf16.mxu0 %v899
        %1321 = vmatpush1.bf16.msra.mxu0 %v898
        %1322 = vmatprep.subr.bf16.mxu0 %v902
        %1323 = vmatpush1.bf16.msra.mxu0 %v901
        %1324 = vmatprep.subr.bf16.mxu0 %v905
        %1325 = vmatpush1.bf16.msra.mxu0 %v904
        %1326 = vmatprep.subr.bf16.mxu0 %v908
        %1327 = vmatpush1.bf16.msra.mxu0 %v907
        %1328 = vmatprep.subr.bf16.mxu0 0
        %1329 = vmatpush1.bf16.msra.mxu0 0
        %1330 = vmatprep.subr.bf16.mxu0 0
        %1331 = vmatpush1.bf16.msra.mxu0 0
        %1332 = vmatprep.subr.bf16.mxu0 0
        %1333 = vmatpush1.bf16.msra.mxu0 0
        %1334 = vmatprep.subr.bf16.mxu0 0
        %1335 = vmatpush1.bf16.msra.mxu0 0
        %1336 = vmatprep.subr.bf16.mxu0 0
        %1337 = vmatpush1.bf16.msra.mxu0 0
        %1338 = vmatprep.subr.bf16.mxu0 0
        %1339 = vmatpush1.bf16.msra.mxu0 0
        %1340 = vmatprep.subr.bf16.mxu0 0
        %1341 = vmatpush1.bf16.msra.mxu0 0
        %1342 = vmatprep.subr.bf16.mxu0 0
        %1343 = vmatpush1.bf16.msra.mxu0 0
        %1344 = vmatprep.mubr.bf16.mxu0 0
        %1345 = vmatmul.mubr.bf16.gmra.mrb[0].mxu0 %v1311
        %v1346 = vpop.f32.mrb[0].mxu0
        %v1347 = vadd.f32 %v794, %v1346
        %v1348 = vpop.f32.mrb[0].mxu0
        %v1349 = vadd.f32 %v798, %v1348
        %v1350 = vpop.f32.mrb[0].mxu0
        %v1351 = vpop.f32.mrb[0].mxu0
        %1352 = vdwg.mxu0
        %1353 = vmatprep.subr.bf16.mxu0 0
        %1354 = vmatpush1.bf16.msra.mxu0 %v888
        %1355 = vmatprep.subr.bf16.mxu0 0
        %1356 = vmatpush1.bf16.msra.mxu0 %v891
        %1357 = vmatprep.subr.bf16.mxu0 0
        %1358 = vmatpush1.bf16.msra.mxu0 %v894
        %1359 = vmatprep.subr.bf16.mxu0 0
        %1360 = vmatpush1.bf16.msra.mxu0 %v897
        %1361 = vmatprep.subr.bf16.mxu0 0
        %1362 = vmatpush1.bf16.msra.mxu0 %v900
        %1363 = vmatprep.subr.bf16.mxu0 0
        %1364 = vmatpush1.bf16.msra.mxu0 %v903
        %1365 = vmatprep.subr.bf16.mxu0 0
        %1366 = vmatpush1.bf16.msra.mxu0 %v906
        %1367 = vmatprep.subr.bf16.mxu0 0
        %1368 = vmatpush1.bf16.msra.mxu0 %v909
        %1369 = vmatprep.subr.bf16.mxu0 0
        %1370 = vmatpush1.bf16.msra.mxu0 0
        %1371 = vmatprep.subr.bf16.mxu0 0
        %1372 = vmatpush1.bf16.msra.mxu0 0
        %1373 = vmatprep.subr.bf16.mxu0 0
        %1374 = vmatpush1.bf16.msra.mxu0 0
        %1375 = vmatprep.subr.bf16.mxu0 0
        %1376 = vmatpush1.bf16.msra.mxu0 0
        %1377 = vmatprep.subr.bf16.mxu0 0
        %1378 = vmatpush1.bf16.msra.mxu0 0
        %1379 = vmatprep.subr.bf16.mxu0 0
        %1380 = vmatpush1.bf16.msra.mxu0 0
        %1381 = vmatprep.subr.bf16.mxu0 0
        %1382 = vmatpush1.bf16.msra.mxu0 0
        %1383 = vmatprep.subr.bf16.mxu0 0
        %1384 = vmatpush1.bf16.msra.mxu0 0
        %1385 = vmatprep.mubr.bf16.mxu0 0
        %1386 = vmatmul.mubr.bf16.gmra.mrb[0].mxu0 %v1311
        %v1387 = vpop.f32.mrb[0].mxu0
        %v1388 = vadd.f32 %v802, %v1387
        %v1389 = vpop.f32.mrb[0].mxu0
        %v1390 = vpop.f32.mrb[0].mxu0
        %v1391 = vpop.f32.mrb[0].mxu0
        %1392 = vdwg.mxu0
        %v1393 = vadd.f32 %v1308, %v1347
        %v1394 = vxor.u32 %v1393, 2147483648
        %v1395 = vmul.f32 %v1394, 1.442695
        %v1396 = vpow.pop %v1395
        %v1397 = vadd.f32 %v1396, 1.0
        %v1398 = vrcp.pop %v1397
        %v1399 = vmul.f32 1.0, %v1398
        %v1400 = vadd.f32 %v1309, %v1349
        %v1401 = vxor.u32 %v1400, 2147483648
        %v1402 = vmul.f32 %v1401, 1.442695
        %v1403 = vpow.pop %v1402
        %v1404 = vadd.f32 %v1403, 1.0
        %v1405 = vrcp.pop %v1404
        %v1406 = vmul.f32 1.0, %v1405
        %v1407 = vmul.f32 %v1399, %v1388
        %v1408 = vadd.f32 %v1310, %v1407
        %v1409 = vtanh.pop %v1408
        %v1410 = vsub.f32 1.0, %v1406
        %v1411 = vmul.f32 %v1410, %v1409
        %v1412 = vmul.f32 %v1406, %v1295
        %v1413 = vadd.f32 %v1411, %v1412
        %v1414 = vstv %s1301
        %vm1415 = vcmp.lt.s32.totalorder %v1414, %v779
        %v1416 = vsel %vm1415, 1, 0
        %1417 = vset.pattern.permute.xlu0 0
        %1418 = vperm.xlu0 %1417, %v1416
        %v1419 = vpop.permute.xlu0 %1418
        %vm1420 = vcmp.eq.s32.totalorder %v1419, 1
        %v1421 = vsel %vm1420, %v1413, %v1295
        %v1422 = vsel %vm1420, %v1413, 0.0
        %s1423 = scalar_lea.vmem %s378, %s1302 [#allocation9]
        %1424 = vst [vmem:[%s1423] sm:$0xff] %v1422
        %s1425 = smul.u32 %s1047, 4
        %s1426 = smul.u32 %s29, 3
        %s1427 = sadd.s32 %s1425, %s1426
        %s1428 = smul.u32 %s1427, 8
        %s1429 = sshra.s32 %s1428, 3
        %s1430 = sand.u32 %s1428, 7
        %s1431 = smul.u32 %s1429, 3
        %s1432 = smul.addr %s1431, 8
        %s1433 = scalar_lea.vmem [#allocation2], %s1432
        %v1434 = vld [vmem:[%s1433] sm:$0xff]
        %v1435 = vld [vmem:[%s1433 + $0x8] sm:$0xff]
        %v1436 = vld [vmem:[%s1433 + $0x10] sm:$0xff]
        %v1437 = vpack.c.bf16 %v1421, %v1421
        %1438 = vmatprep.subr.bf16.mxu0 %v887
        %1439 = vmatpush1.bf16.msra.mxu0 %v886
        %1440 = vmatprep.subr.bf16.mxu0 %v890
        %1441 = vmatpush1.bf16.msra.mxu0 %v889
        %1442 = vmatprep.subr.bf16.mxu0 %v893
        %1443 = vmatpush1.bf16.msra.mxu0 %v892
        %1444 = vmatprep.subr.bf16.mxu0 %v896
        %1445 = vmatpush1.bf16.msra.mxu0 %v895
        %1446 = vmatprep.subr.bf16.mxu0 %v899
        %1447 = vmatpush1.bf16.msra.mxu0 %v898
        %1448 = vmatprep.subr.bf16.mxu0 %v902
        %1449 = vmatpush1.bf16.msra.mxu0 %v901
        %1450 = vmatprep.subr.bf16.mxu0 %v905
        %1451 = vmatpush1.bf16.msra.mxu0 %v904
        %1452 = vmatprep.subr.bf16.mxu0 %v908
        %1453 = vmatpush1.bf16.msra.mxu0 %v907
        %1454 = vmatprep.subr.bf16.mxu0 0
        %1455 = vmatpush1.bf16.msra.mxu0 0
        %1456 = vmatprep.subr.bf16.mxu0 0
        %1457 = vmatpush1.bf16.msra.mxu0 0
        %1458 = vmatprep.subr.bf16.mxu0 0
        %1459 = vmatpush1.bf16.msra.mxu0 0
        %1460 = vmatprep.subr.bf16.mxu0 0
        %1461 = vmatpush1.bf16.msra.mxu0 0
        %1462 = vmatprep.subr.bf16.mxu0 0
        %1463 = vmatpush1.bf16.msra.mxu0 0
        %1464 = vmatprep.subr.bf16.mxu0 0
        %1465 = vmatpush1.bf16.msra.mxu0 0
        %1466 = vmatprep.subr.bf16.mxu0 0
        %1467 = vmatpush1.bf16.msra.mxu0 0
        %1468 = vmatprep.subr.bf16.mxu0 0
        %1469 = vmatpush1.bf16.msra.mxu0 0
        %1470 = vmatprep.mubr.bf16.mxu0 0
        %1471 = vmatmul.mubr.bf16.gmra.mrb[0].mxu0 %v1437
        %v1472 = vpop.f32.mrb[0].mxu0
        %v1473 = vadd.f32 %v794, %v1472
        %v1474 = vpop.f32.mrb[0].mxu0
        %v1475 = vadd.f32 %v798, %v1474
        %v1476 = vpop.f32.mrb[0].mxu0
        %v1477 = vpop.f32.mrb[0].mxu0
        %1478 = vdwg.mxu0
        %1479 = vmatprep.subr.bf16.mxu0 0
        %1480 = vmatpush1.bf16.msra.mxu0 %v888
        %1481 = vmatprep.subr.bf16.mxu0 0
        %1482 = vmatpush1.bf16.msra.mxu0 %v891
        %1483 = vmatprep.subr.bf16.mxu0 0
        %1484 = vmatpush1.bf16.msra.mxu0 %v894
        %1485 = vmatprep.subr.bf16.mxu0 0
        %1486 = vmatpush1.bf16.msra.mxu0 %v897
        %1487 = vmatprep.subr.bf16.mxu0 0
        %1488 = vmatpush1.bf16.msra.mxu0 %v900
        %1489 = vmatprep.subr.bf16.mxu0 0
        %1490 = vmatpush1.bf16.msra.mxu0 %v903
        %1491 = vmatprep.subr.bf16.mxu0 0
        %1492 = vmatpush1.bf16.msra.mxu0 %v906
        %1493 = vmatprep.subr.bf16.mxu0 0
        %1494 = vmatpush1.bf16.msra.mxu0 %v909
        %1495 = vmatprep.subr.bf16.mxu0 0
        %1496 = vmatpush1.bf16.msra.mxu0 0
        %1497 = vmatprep.subr.bf16.mxu0 0
        %1498 = vmatpush1.bf16.msra.mxu0 0
        %1499 = vmatprep.subr.bf16.mxu0 0
        %1500 = vmatpush1.bf16.msra.mxu0 0
        %1501 = vmatprep.subr.bf16.mxu0 0
        %1502 = vmatpush1.bf16.msra.mxu0 0
        %1503 = vmatprep.subr.bf16.mxu0 0
        %1504 = vmatpush1.bf16.msra.mxu0 0
        %1505 = vmatprep.subr.bf16.mxu0 0
        %1506 = vmatpush1.bf16.msra.mxu0 0
        %1507 = vmatprep.subr.bf16.mxu0 0
        %1508 = vmatpush1.bf16.msra.mxu0 0
        %1509 = vmatprep.subr.bf16.mxu0 0
        %1510 = vmatpush1.bf16.msra.mxu0 0
        %1511 = vmatprep.mubr.bf16.mxu0 0
        %1512 = vmatmul.mubr.bf16.gmra.mrb[0].mxu0 %v1437
        %v1513 = vpop.f32.mrb[0].mxu0
        %v1514 = vadd.f32 %v802, %v1513
        %v1515 = vpop.f32.mrb[0].mxu0
        %v1516 = vpop.f32.mrb[0].mxu0
        %v1517 = vpop.f32.mrb[0].mxu0
        %1518 = vdwg.mxu0
        %v1519 = vadd.f32 %v1434, %v1473
        %v1520 = vxor.u32 %v1519, 2147483648
        %v1521 = vmul.f32 %v1520, 1.442695
        %v1522 = vpow.pop %v1521
        %v1523 = vadd.f32 %v1522, 1.0
        %v1524 = vrcp.pop %v1523
        %v1525 = vmul.f32 1.0, %v1524
        %v1526 = vadd.f32 %v1435, %v1475
        %v1527 = vxor.u32 %v1526, 2147483648
        %v1528 = vmul.f32 %v1527, 1.442695
        %v1529 = vpow.pop %v1528
        %v1530 = vadd.f32 %v1529, 1.0
        %v1531 = vrcp.pop %v1530
        %v1532 = vmul.f32 1.0, %v1531
        %v1533 = vmul.f32 %v1525, %v1514
        %v1534 = vadd.f32 %v1436, %v1533
        %v1535 = vtanh.pop %v1534
        %v1536 = vsub.f32 1.0, %v1532
        %v1537 = vmul.f32 %v1536, %v1535
        %v1538 = vmul.f32 %v1532, %v1421
        %v1539 = vadd.f32 %v1537, %v1538
        %v1540 = vstv %s1427
        %vm1541 = vcmp.lt.s32.totalorder %v1540, %v779
        %v1542 = vsel %vm1541, 1, 0
        %1543 = vset.pattern.permute.xlu0 0
        %1544 = vperm.xlu0 %1543, %v1542
        %v1545 = vpop.permute.xlu0 %1544
        %vm1546 = vcmp.eq.s32.totalorder %v1545, 1
        %v1547 = vsel %vm1546, %v1539, %v1421
        %v1548 = vsel %vm1546, %v1539, 0.0
        %s1549 = scalar_lea.vmem %s378, %s1428 [#allocation9]
        %1550 = vst [vmem:[%s1549] sm:$0xff] %v1548
        %s1551 = smul.u32 %s1047, 5
        %s1552 = smul.u32 %s29, 2
        %s1553 = sadd.s32 %s1551, %s1552
        %s1554 = smul.u32 %s1553, 8
        %s1555 = sshra.s32 %s1554, 3
        %s1556 = sand.u32 %s1554, 7
        %s1557 = smul.u32 %s1555, 3
        %s1558 = smul.addr %s1557, 8
        %s1559 = scalar_lea.vmem [#allocation2], %s1558
        %v1560 = vld [vmem:[%s1559] sm:$0xff]
        %v1561 = vld [vmem:[%s1559 + $0x8] sm:$0xff]
        %v1562 = vld [vmem:[%s1559 + $0x10] sm:$0xff]
        %v1563 = vpack.c.bf16 %v1547, %v1547
        %1564 = vmatprep.subr.bf16.mxu0 %v887
        %1565 = vmatpush1.bf16.msra.mxu0 %v886
        %1566 = vmatprep.subr.bf16.mxu0 %v890
        %1567 = vmatpush1.bf16.msra.mxu0 %v889
        %1568 = vmatprep.subr.bf16.mxu0 %v893
        %1569 = vmatpush1.bf16.msra.mxu0 %v892
        %1570 = vmatprep.subr.bf16.mxu0 %v896
        %1571 = vmatpush1.bf16.msra.mxu0 %v895
        %1572 = vmatprep.subr.bf16.mxu0 %v899
        %1573 = vmatpush1.bf16.msra.mxu0 %v898
        %1574 = vmatprep.subr.bf16.mxu0 %v902
        %1575 = vmatpush1.bf16.msra.mxu0 %v901
        %1576 = vmatprep.subr.bf16.mxu0 %v905
        %1577 = vmatpush1.bf16.msra.mxu0 %v904
        %1578 = vmatprep.subr.bf16.mxu0 %v908
        %1579 = vmatpush1.bf16.msra.mxu0 %v907
        %1580 = vmatprep.subr.bf16.mxu0 0
        %1581 = vmatpush1.bf16.msra.mxu0 0
        %1582 = vmatprep.subr.bf16.mxu0 0
        %1583 = vmatpush1.bf16.msra.mxu0 0
        %1584 = vmatprep.subr.bf16.mxu0 0
        %1585 = vmatpush1.bf16.msra.mxu0 0
        %1586 = vmatprep.subr.bf16.mxu0 0
        %1587 = vmatpush1.bf16.msra.mxu0 0
        %1588 = vmatprep.subr.bf16.mxu0 0
        %1589 = vmatpush1.bf16.msra.mxu0 0
        %1590 = vmatprep.subr.bf16.mxu0 0
        %1591 = vmatpush1.bf16.msra.mxu0 0
        %1592 = vmatprep.subr.bf16.mxu0 0
        %1593 = vmatpush1.bf16.msra.mxu0 0
        %1594 = vmatprep.subr.bf16.mxu0 0
        %1595 = vmatpush1.bf16.msra.mxu0 0
        %1596 = vmatprep.mubr.bf16.mxu0 0
        %1597 = vmatmul.mubr.bf16.gmra.mrb[0].mxu0 %v1563
        %v1598 = vpop.f32.mrb[0].mxu0
        %v1599 = vadd.f32 %v794, %v1598
        %v1600 = vpop.f32.mrb[0].mxu0
        %v1601 = vadd.f32 %v798, %v1600
        %v1602 = vpop.f32.mrb[0].mxu0
        %v1603 = vpop.f32.mrb[0].mxu0
        %1604 = vdwg.mxu0
        %1605 = vmatprep.subr.bf16.mxu0 0
        %1606 = vmatpush1.bf16.msra.mxu0 %v888
        %1607 = vmatprep.subr.bf16.mxu0 0
        %1608 = vmatpush1.bf16.msra.mxu0 %v891
        %1609 = vmatprep.subr.bf16.mxu0 0
        %1610 = vmatpush1.bf16.msra.mxu0 %v894
        %1611 = vmatprep.subr.bf16.mxu0 0
        %1612 = vmatpush1.bf16.msra.mxu0 %v897
        %1613 = vmatprep.subr.bf16.mxu0 0
        %1614 = vmatpush1.bf16.msra.mxu0 %v900
        %1615 = vmatprep.subr.bf16.mxu0 0
        %1616 = vmatpush1.bf16.msra.mxu0 %v903
        %1617 = vmatprep.subr.bf16.mxu0 0
        %1618 = vmatpush1.bf16.msra.mxu0 %v906
        %1619 = vmatprep.subr.bf16.mxu0 0
        %1620 = vmatpush1.bf16.msra.mxu0 %v909
        %1621 = vmatprep.subr.bf16.mxu0 0
        %1622 = vmatpush1.bf16.msra.mxu0 0
        %1623 = vmatprep.subr.bf16.mxu0 0
        %1624 = vmatpush1.bf16.msra.mxu0 0
        %1625 = vmatprep.subr.bf16.mxu0 0
        %1626 = vmatpush1.bf16.msra.mxu0 0
        %1627 = vmatprep.subr.bf16.mxu0 0
        %1628 = vmatpush1.bf16.msra.mxu0 0
        %1629 = vmatprep.subr.bf16.mxu0 0
        %1630 = vmatpush1.bf16.msra.mxu0 0
        %1631 = vmatprep.subr.bf16.mxu0 0
        %1632 = vmatpush1.bf16.msra.mxu0 0
        %1633 = vmatprep.subr.bf16.mxu0 0
        %1634 = vmatpush1.bf16.msra.mxu0 0
        %1635 = vmatprep.subr.bf16.mxu0 0
        %1636 = vmatpush1.bf16.msra.mxu0 0
        %1637 = vmatprep.mubr.bf16.mxu0 0
        %1638 = vmatmul.mubr.bf16.gmra.mrb[0].mxu0 %v1563
        %v1639 = vpop.f32.mrb[0].mxu0
        %v1640 = vadd.f32 %v802, %v1639
        %v1641 = vpop.f32.mrb[0].mxu0
        %v1642 = vpop.f32.mrb[0].mxu0
        %v1643 = vpop.f32.mrb[0].mxu0
        %1644 = vdwg.mxu0
        %v1645 = vadd.f32 %v1560, %v1599
        %v1646 = vxor.u32 %v1645, 2147483648
        %v1647 = vmul.f32 %v1646, 1.442695
        %v1648 = vpow.pop %v1647
        %v1649 = vadd.f32 %v1648, 1.0
        %v1650 = vrcp.pop %v1649
        %v1651 = vmul.f32 1.0, %v1650
        %v1652 = vadd.f32 %v1561, %v1601
        %v1653 = vxor.u32 %v1652, 2147483648
        %v1654 = vmul.f32 %v1653, 1.442695
        %v1655 = vpow.pop %v1654
        %v1656 = vadd.f32 %v1655, 1.0
        %v1657 = vrcp.pop %v1656
        %v1658 = vmul.f32 1.0, %v1657
        %v1659 = vmul.f32 %v1651, %v1640
        %v1660 = vadd.f32 %v1562, %v1659
        %v1661 = vtanh.pop %v1660
        %v1662 = vsub.f32 1.0, %v1658
        %v1663 = vmul.f32 %v1662, %v1661
        %v1664 = vmul.f32 %v1658, %v1547
        %v1665 = vadd.f32 %v1663, %v1664
        %v1666 = vstv %s1553
        %vm1667 = vcmp.lt.s32.totalorder %v1666, %v779
        %v1668 = vsel %vm1667, 1, 0
        %1669 = vset.pattern.permute.xlu0 0
        %1670 = vperm.xlu0 %1669, %v1668
        %v1671 = vpop.permute.xlu0 %1670
        %vm1672 = vcmp.eq.s32.totalorder %v1671, 1
        %v1673 = vsel %vm1672, %v1665, %v1547
        %v1674 = vsel %vm1672, %v1665, 0.0
        %s1675 = scalar_lea.vmem %s378, %s1554 [#allocation9]
        %1676 = vst [vmem:[%s1675] sm:$0xff] %v1674
        %s1677 = smul.u32 %s1047, 6
        %s1678 = sadd.s32 %s1677, %s29
        %s1679 = smul.u32 %s1678, 8
        %s1680 = sshra.s32 %s1679, 3
        %s1681 = sand.u32 %s1679, 7
        %s1682 = smul.u32 %s1680, 3
        %s1683 = smul.addr %s1682, 8
        %s1684 = scalar_lea.vmem [#allocation2], %s1683
        %v1685 = vld [vmem:[%s1684] sm:$0xff]
        %v1686 = vld [vmem:[%s1684 + $0x8] sm:$0xff]
        %v1687 = vld [vmem:[%s1684 + $0x10] sm:$0xff]
        %v1688 = vpack.c.bf16 %v1673, %v1673
        %1689 = vmatprep.subr.bf16.mxu0 %v887
        %1690 = vmatpush1.bf16.msra.mxu0 %v886
        %1691 = vmatprep.subr.bf16.mxu0 %v890
        %1692 = vmatpush1.bf16.msra.mxu0 %v889
        %1693 = vmatprep.subr.bf16.mxu0 %v893
        %1694 = vmatpush1.bf16.msra.mxu0 %v892
        %1695 = vmatprep.subr.bf16.mxu0 %v896
        %1696 = vmatpush1.bf16.msra.mxu0 %v895
        %1697 = vmatprep.subr.bf16.mxu0 %v899
        %1698 = vmatpush1.bf16.msra.mxu0 %v898
        %1699 = vmatprep.subr.bf16.mxu0 %v902
        %1700 = vmatpush1.bf16.msra.mxu0 %v901
        %1701 = vmatprep.subr.bf16.mxu0 %v905
        %1702 = vmatpush1.bf16.msra.mxu0 %v904
        %1703 = vmatprep.subr.bf16.mxu0 %v908
        %1704 = vmatpush1.bf16.msra.mxu0 %v907
        %1705 = vmatprep.subr.bf16.mxu0 0
        %1706 = vmatpush1.bf16.msra.mxu0 0
        %1707 = vmatprep.subr.bf16.mxu0 0
        %1708 = vmatpush1.bf16.msra.mxu0 0
        %1709 = vmatprep.subr.bf16.mxu0 0
        %1710 = vmatpush1.bf16.msra.mxu0 0
        %1711 = vmatprep.subr.bf16.mxu0 0
        %1712 = vmatpush1.bf16.msra.mxu0 0
        %1713 = vmatprep.subr.bf16.mxu0 0
        %1714 = vmatpush1.bf16.msra.mxu0 0
        %1715 = vmatprep.subr.bf16.mxu0 0
        %1716 = vmatpush1.bf16.msra.mxu0 0
        %1717 = vmatprep.subr.bf16.mxu0 0
        %1718 = vmatpush1.bf16.msra.mxu0 0
        %1719 = vmatprep.subr.bf16.mxu0 0
        %1720 = vmatpush1.bf16.msra.mxu0 0
        %1721 = vmatprep.mubr.bf16.mxu0 0
        %1722 = vmatmul.mubr.bf16.gmra.mrb[0].mxu0 %v1688
        %v1723 = vpop.f32.mrb[0].mxu0
        %v1724 = vadd.f32 %v794, %v1723
        %v1725 = vpop.f32.mrb[0].mxu0
        %v1726 = vadd.f32 %v798, %v1725
        %v1727 = vpop.f32.mrb[0].mxu0
        %v1728 = vpop.f32.mrb[0].mxu0
        %1729 = vdwg.mxu0
        %1730 = vmatprep.subr.bf16.mxu0 0
        %1731 = vmatpush1.bf16.msra.mxu0 %v888
        %1732 = vmatprep.subr.bf16.mxu0 0
        %1733 = vmatpush1.bf16.msra.mxu0 %v891
        %1734 = vmatprep.subr.bf16.mxu0 0
        %1735 = vmatpush1.bf16.msra.mxu0 %v894
        %1736 = vmatprep.subr.bf16.mxu0 0
        %1737 = vmatpush1.bf16.msra.mxu0 %v897
        %1738 = vmatprep.subr.bf16.mxu0 0
        %1739 = vmatpush1.bf16.msra.mxu0 %v900
        %1740 = vmatprep.subr.bf16.mxu0 0
        %1741 = vmatpush1.bf16.msra.mxu0 %v903
        %1742 = vmatprep.subr.bf16.mxu0 0
        %1743 = vmatpush1.bf16.msra.mxu0 %v906
        %1744 = vmatprep.subr.bf16.mxu0 0
        %1745 = vmatpush1.bf16.msra.mxu0 %v909
        %1746 = vmatprep.subr.bf16.mxu0 0
        %1747 = vmatpush1.bf16.msra.mxu0 0
        %1748 = vmatprep.subr.bf16.mxu0 0
        %1749 = vmatpush1.bf16.msra.mxu0 0
        %1750 = vmatprep.subr.bf16.mxu0 0
        %1751 = vmatpush1.bf16.msra.mxu0 0
        %1752 = vmatprep.subr.bf16.mxu0 0
        %1753 = vmatpush1.bf16.msra.mxu0 0
        %1754 = vmatprep.subr.bf16.mxu0 0
        %1755 = vmatpush1.bf16.msra.mxu0 0
        %1756 = vmatprep.subr.bf16.mxu0 0
        %1757 = vmatpush1.bf16.msra.mxu0 0
        %1758 = vmatprep.subr.bf16.mxu0 0
        %1759 = vmatpush1.bf16.msra.mxu0 0
        %1760 = vmatprep.subr.bf16.mxu0 0
        %1761 = vmatpush1.bf16.msra.mxu0 0
        %1762 = vmatprep.mubr.bf16.mxu0 0
        %1763 = vmatmul.mubr.bf16.gmra.mrb[0].mxu0 %v1688
        %v1764 = vpop.f32.mrb[0].mxu0
        %v1765 = vadd.f32 %v802, %v1764
        %v1766 = vpop.f32.mrb[0].mxu0
        %v1767 = vpop.f32.mrb[0].mxu0
        %v1768 = vpop.f32.mrb[0].mxu0
        %1769 = vdwg.mxu0
        %v1770 = vadd.f32 %v1685, %v1724
        %v1771 = vxor.u32 %v1770, 2147483648
        %v1772 = vmul.f32 %v1771, 1.442695
        %v1773 = vpow.pop %v1772
        %v1774 = vadd.f32 %v1773, 1.0
        %v1775 = vrcp.pop %v1774
        %v1776 = vmul.f32 1.0, %v1775
        %v1777 = vadd.f32 %v1686, %v1726
        %v1778 = vxor.u32 %v1777, 2147483648
        %v1779 = vmul.f32 %v1778, 1.442695
        %v1780 = vpow.pop %v1779
        %v1781 = vadd.f32 %v1780, 1.0
        %v1782 = vrcp.pop %v1781
        %v1783 = vmul.f32 1.0, %v1782
        %v1784 = vmul.f32 %v1776, %v1765
        %v1785 = vadd.f32 %v1687, %v1784
        %v1786 = vtanh.pop %v1785
        %v1787 = vsub.f32 1.0, %v1783
        %v1788 = vmul.f32 %v1787, %v1786
        %v1789 = vmul.f32 %v1783, %v1673
        %v1790 = vadd.f32 %v1788, %v1789
        %v1791 = vstv %s1678
        %vm1792 = vcmp.lt.s32.totalorder %v1791, %v779
        %v1793 = vsel %vm1792, 1, 0
        %1794 = vset.pattern.permute.xlu0 0
        %1795 = vperm.xlu0 %1794, %v1793
        %v1796 = vpop.permute.xlu0 %1795
        %vm1797 = vcmp.eq.s32.totalorder %v1796, 1
        %v1798 = vsel %vm1797, %v1790, %v1673
        %v1799 = vsel %vm1797, %v1790, 0.0
        %s1800 = scalar_lea.vmem %s378, %s1679 [#allocation9]
        %1801 = vst [vmem:[%s1800] sm:$0xff] %v1799
        %s1802 = smul.u32 %s1047, 7
        %s1803 = smul.u32 %s1047, 56
        %s1804 = sshra.s32 %s1803, 3
        %s1805 = sand.u32 %s1803, 7
        %s1806 = smul.u32 %s1804, 3
        %s1807 = smul.addr %s1806, 8
        %s1808 = scalar_lea.vmem [#allocation2], %s1807
        %v1809 = vld [vmem:[%s1808] sm:$0xff]
        %v1810 = vld [vmem:[%s1808 + $0x8] sm:$0xff]
        %v1811 = vld [vmem:[%s1808 + $0x10] sm:$0xff]
        %v1812 = vpack.c.bf16 %v1798, %v1798
        %1813 = vmatprep.subr.bf16.mxu0 %v887
        %1814 = vmatpush1.bf16.msra.mxu0 %v886
        %1815 = vmatprep.subr.bf16.mxu0 %v890
        %1816 = vmatpush1.bf16.msra.mxu0 %v889
        %1817 = vmatprep.subr.bf16.mxu0 %v893
        %1818 = vmatpush1.bf16.msra.mxu0 %v892
        %1819 = vmatprep.subr.bf16.mxu0 %v896
        %1820 = vmatpush1.bf16.msra.mxu0 %v895
        %1821 = vmatprep.subr.bf16.mxu0 %v899
        %1822 = vmatpush1.bf16.msra.mxu0 %v898
        %1823 = vmatprep.subr.bf16.mxu0 %v902
        %1824 = vmatpush1.bf16.msra.mxu0 %v901
        %1825 = vmatprep.subr.bf16.mxu0 %v905
        %1826 = vmatpush1.bf16.msra.mxu0 %v904
        %1827 = vmatprep.subr.bf16.mxu0 %v908
        %1828 = vmatpush1.bf16.msra.mxu0 %v907
        %1829 = vmatprep.subr.bf16.mxu0 0
        %1830 = vmatpush1.bf16.msra.mxu0 0
        %1831 = vmatprep.subr.bf16.mxu0 0
        %1832 = vmatpush1.bf16.msra.mxu0 0
        %1833 = vmatprep.subr.bf16.mxu0 0
        %1834 = vmatpush1.bf16.msra.mxu0 0
        %1835 = vmatprep.subr.bf16.mxu0 0
        %1836 = vmatpush1.bf16.msra.mxu0 0
        %1837 = vmatprep.subr.bf16.mxu0 0
        %1838 = vmatpush1.bf16.msra.mxu0 0
        %1839 = vmatprep.subr.bf16.mxu0 0
        %1840 = vmatpush1.bf16.msra.mxu0 0
        %1841 = vmatprep.subr.bf16.mxu0 0
        %1842 = vmatpush1.bf16.msra.mxu0 0
        %1843 = vmatprep.subr.bf16.mxu0 0
        %1844 = vmatpush1.bf16.msra.mxu0 0
        %1845 = vmatprep.mubr.bf16.mxu0 0
        %1846 = vmatmul.mubr.bf16.gmra.mrb[0].mxu0 %v1812
        %v1847 = vpop.f32.mrb[0].mxu0
        %v1848 = vadd.f32 %v794, %v1847
        %v1849 = vpop.f32.mrb[0].mxu0
        %v1850 = vadd.f32 %v798, %v1849
        %v1851 = vpop.f32.mrb[0].mxu0
        %v1852 = vpop.f32.mrb[0].mxu0
        %1853 = vdwg.mxu0
        %1854 = vmatprep.subr.bf16.mxu0 0
        %1855 = vmatpush1.bf16.msra.mxu0 %v888
        %1856 = vmatprep.subr.bf16.mxu0 0
        %1857 = vmatpush1.bf16.msra.mxu0 %v891
        %1858 = vmatprep.subr.bf16.mxu0 0
        %1859 = vmatpush1.bf16.msra.mxu0 %v894
        %1860 = vmatprep.subr.bf16.mxu0 0
        %1861 = vmatpush1.bf16.msra.mxu0 %v897
        %1862 = vmatprep.subr.bf16.mxu0 0
        %1863 = vmatpush1.bf16.msra.mxu0 %v900
        %1864 = vmatprep.subr.bf16.mxu0 0
        %1865 = vmatpush1.bf16.msra.mxu0 %v903
        %1866 = vmatprep.subr.bf16.mxu0 0
        %1867 = vmatpush1.bf16.msra.mxu0 %v906
        %1868 = vmatprep.subr.bf16.mxu0 0
        %1869 = vmatpush1.bf16.msra.mxu0 %v909
        %1870 = vmatprep.subr.bf16.mxu0 0
        %1871 = vmatpush1.bf16.msra.mxu0 0
        %1872 = vmatprep.subr.bf16.mxu0 0
        %1873 = vmatpush1.bf16.msra.mxu0 0
        %1874 = vmatprep.subr.bf16.mxu0 0
        %1875 = vmatpush1.bf16.msra.mxu0 0
        %1876 = vmatprep.subr.bf16.mxu0 0
        %1877 = vmatpush1.bf16.msra.mxu0 0
        %1878 = vmatprep.subr.bf16.mxu0 0
        %1879 = vmatpush1.bf16.msra.mxu0 0
        %1880 = vmatprep.subr.bf16.mxu0 0
        %1881 = vmatpush1.bf16.msra.mxu0 0
        %1882 = vmatprep.subr.bf16.mxu0 0
        %1883 = vmatpush1.bf16.msra.mxu0 0
        %1884 = vmatprep.subr.bf16.mxu0 0
        %1885 = vmatpush1.bf16.msra.mxu0 0
        %1886 = vmatprep.mubr.bf16.mxu0 0
        %1887 = vmatmul.mubr.bf16.gmra.mrb[0].mxu0 %v1812
        %v1888 = vpop.f32.mrb[0].mxu0
        %v1889 = vadd.f32 %v802, %v1888
        %v1890 = vpop.f32.mrb[0].mxu0
        %v1891 = vpop.f32.mrb[0].mxu0
        %v1892 = vpop.f32.mrb[0].mxu0
        %1893 = vdwg.mxu0
        %v1894 = vadd.f32 %v1809, %v1848
        %v1895 = vxor.u32 %v1894, 2147483648
        %v1896 = vmul.f32 %v1895, 1.442695
        %v1897 = vpow.pop %v1896
        %v1898 = vadd.f32 %v1897, 1.0
        %v1899 = vrcp.pop %v1898
        %v1900 = vmul.f32 1.0, %v1899
        %v1901 = vadd.f32 %v1810, %v1850
        %v1902 = vxor.u32 %v1901, 2147483648
        %v1903 = vmul.f32 %v1902, 1.442695
        %v1904 = vpow.pop %v1903
        %v1905 = vadd.f32 %v1904, 1.0
        %v1906 = vrcp.pop %v1905
        %v1907 = vmul.f32 1.0, %v1906
        %v1908 = vmul.f32 %v1900, %v1889
        %v1909 = vadd.f32 %v1811, %v1908
        %v1910 = vtanh.pop %v1909
        %v1911 = vsub.f32 1.0, %v1907
        %v1912 = vmul.f32 %v1911, %v1910
        %v1913 = vmul.f32 %v1907, %v1798
        %v1914 = vadd.f32 %v1912, %v1913
        %v1915 = vstv %s1802
        %vm1916 = vcmp.lt.s32.totalorder %v1915, %v779
        %v1917 = vsel %vm1916, 1, 0
        %1918 = vset.pattern.permute.xlu0 0
        %1919 = vperm.xlu0 %1918, %v1917
        %v1920 = vpop.permute.xlu0 %1919
        %vm1921 = vcmp.eq.s32.totalorder %v1920, 1
        %v1922 = vsel %vm1921, %v1914, %v1798
        %v1923 = vsel %vm1921, %v1914, 0.0
        %s1924 = smul.u32 %s1802, 8
        %s1925 = scalar_lea.vmem %s378, %s1924 [#allocation9]
        %1926 = vst [vmem:[%s1925] sm:$0xff] %v1923
        %1927 = vst [vmem:[%s385] sm:$0xff] %v1922
        %s1928 = sand.u32 %s183, 1
        %s1929 = scalar_lea.sflag [#allocation5], %s1928
        %s1930 = sand.u32 %s183, 1
        %s1931 = smul.addr %s1930, 64
        %s1932 = scalar_lea.vmem [#allocation9], %s1931
        %s1933 = sand.u32 %s209, 1
        %s1934 = scalar_lea.sflag [#allocation11], %s1933
        %s1935 = sand.u32 %s209, 1
        %s1936 = smul.addr %s1935, 8
        %s1937 = scalar_lea.vmem [#allocation10], %s1936
        // Predicated region
        $region57: #{tpu_custom_call.1} parent=43 // pred_check
          %p1938 = pneg %p193
        $region58: #{tpu_custom_call.1} parent=43 // pred_check_branch
          %1940 = sbr.rel (%p1938) target = $region60
        $region59: #{tpu_custom_call.1} parent=43 // pred_region
          %s1942 = ssub.s32 1024, 1024
          %1943 = vsyncadd %s1929, %s1942
          %s1944 = smul.addr %s29, 8
          %s1945 = smul.addr %s1944, 128
          %s1946 = scalar_lea.hbm %s6, %s1945
          %s1947 = sshll.u32 %s1932, 4
          %s1948 = int_to_ptr.vmem [resolvable:$true] %s1947
          %1953 = dma.vmem_to_hbm [thread:$0]  %s1948, 1024, %s1946, %s1929, 128, 128, 8
        $region60: #{tpu_custom_call.1} parent=43 // pred_fallthru
          _
        // Predicated region
        $region61: #{tpu_custom_call.1} parent=43 // pred_check
          %p1954 = pneg %p219
        $region62: #{tpu_custom_call.1} parent=43 // pred_check_branch
          %1956 = sbr.rel (%p1954) target = $region64
        $region63: #{tpu_custom_call.1} parent=43 // pred_region
          %s1958 = ssub.s32 128, 128
          %1959 = vsyncadd %s1934, %s1958
          %s1960 = smul.addr %s29, 128
          %s1961 = scalar_lea.hbm %s7, %s1960
          %s1963 = sshll.u32 %s1937, 4
          %s1964 = int_to_ptr.vmem [resolvable:$true] %s1963
          %1966 = dma.vmem_to_hbm [thread:$0]  %s1964, 128, %s1961, %s1934
        $region64: #{tpu_custom_call.1} parent=43 // pred_fallthru
          _
      $region44: #{tpu_custom_call.1} parent=5 // pred_fallthru
        _
      %p1967 = scmp.le.s32.totalorder 2, %s24
      // Predicated region
      $region65: #{tpu_custom_call.1} parent=5 // pred_check
        %p1968 = pneg %p1967
      $region66: #{tpu_custom_call.1} parent=5 // pred_check_branch
        %1970 = sbr.rel (%p1968) target = $region68
      $region67: #{tpu_custom_call.1} parent=5 // pred_region
        %s1971 = ssub.s32 %s24, 2
        // Predicated region
        $region69: #{tpu_custom_call.1} parent=67 // pred_check
          %p1972 = pneg %p199
        $region70: #{tpu_custom_call.1} parent=67 // pred_check_branch
          %1974 = sbr.rel (%p1972) target = $region72
        $region71: #{tpu_custom_call.1} parent=67 // pred_region
          %s1975 = sand.u32 %s184, 1
          %s1976 = scalar_lea.sflag [#allocation5], %s1975
          %s1977 = sand.u32 %s184, 1
          %s1978 = smul.addr %s1977, 64
          %s1979 = scalar_lea.vmem [#allocation9], %s1978
          %1980 = dma.done %s1976, 1024
        $region72: #{tpu_custom_call.1} parent=67 // pred_fallthru
          _
        // Predicated region
        $region73: #{tpu_custom_call.1} parent=67 // pred_check
          %p1981 = pneg %p225
        $region74: #{tpu_custom_call.1} parent=67 // pred_check_branch
          %1983 = sbr.rel (%p1981) target = $region76
        $region75: #{tpu_custom_call.1} parent=67 // pred_region
          %s1984 = sand.u32 %s210, 1
          %s1985 = scalar_lea.sflag [#allocation11], %s1984
          %s1986 = sand.u32 %s210, 1
          %s1987 = smul.addr %s1986, 8
          %s1988 = scalar_lea.vmem [#allocation10], %s1987
          %1989 = dma.done %s1985, 128
        $region76: #{tpu_custom_call.1} parent=67 // pred_fallthru
          _
      $region68: #{tpu_custom_call.1} parent=5 // pred_fallthru
        _
    $region6: #{tpu_custom_call.1} parent=1 // loop_footer
      %s28 = sadd.s32 1, %s24
    $region7: #{tpu_custom_call.1} parent=1 // loop_footer_branch
      %23 = sbr.rel target = $region3
    $region8: #{tpu_custom_call.1} parent=1 // loop_exit
      _
    %1990 = vsyncpa [#allocation4], 1
    %s1991 = scalar_lea.sflag [#allocation4], 1
    %1992 = vsyncpa %s1991, 1
    %1993 = vsyncpa [#allocation7], 1
    %s1994 = scalar_lea.sflag [#allocation7], 1
    %1995 = vsyncpa %s1994, 1
    %1996 = vsyncpa [#allocation5], 1
    %s1997 = scalar_lea.sflag [#allocation5], 1
    %1998 = vsyncpa %s1997, 1
    %1999 = vsyncpa [#allocation11], 1
    %s2000 = scalar_lea.sflag [#allocation11], 1
    %2001 = vsyncpa %s2000, 1

</llo_original>
